<compile_context>
chip_gen: v6e
topology: v6e:2x2x1
jax: 0.10.0
libtpu: 0.0.40
codegen_flags: <defaults>
</compile_context>

<pallas_src>
import functools

import jax
import jax.numpy as jnp
from jax import lax
from jax.experimental import pallas as pl
from jax.experimental.pallas import tpu as pltpu

PAD = 0


def _round_up(x, m):
    return (x + m - 1) // m * m


def decoder_kernel(
    gx_ref, ctx_ref, bias_ref,
    w_rec_ref, w_qo_ref, wctx_ref, bctx_ref, v_ref,
    wout_c_ref, bout_ref,
    packed_ref,
    ctxp_ref, ch_ref, c_ref,
    *, approx_recip: bool, unroll: int,
):
    """One (batch tile, time chunk) per grid iteration; TT timesteps in-kernel."""
    TT, TB, four_h = gx_ref.shape
    H = four_h // 4
    _, S, E = ctx_ref.shape
    M = v_ref.shape[-1]
    PACK = packed_ref.shape[-1]
    cdt = w_rec_ref.dtype            # MXU operand dtype (f32 or bf16)
    edt = ctxp_ref.dtype             # attention elementwise dtype (f32 or bf16)
    f32 = jnp.float32

    tc = pl.program_id(1)            # time-chunk index (sequential / "arbitrary")

    @pl.when(tc == 0)
    def _init():
        # Carry reset + MLP-attention context projection, once per batch tile.
        ch_ref[...] = jnp.zeros_like(ch_ref)
        c_ref[...] = jnp.zeros_like(c_ref)
        ctx_c = ctx_ref[...]                                          # (TB, S, E)
        ctxp = (jnp.dot(ctx_c.reshape(TB * S, E), wctx_ref[...],
                        preferred_element_type=f32)
                .reshape(TB, S, M) + bctx_ref[...])                   # (TB, S, M) f32
        ctxp_ref[...] = ctxp.astype(edt)

    bias = bias_ref[...]                        # (TB, S) additive mask (-inf on PAD)
    v_row = v_ref[...].astype(edt)              # (1, 1, M)
    b_out = bout_ref[...]                       # (1, H)
    pad_w = PACK - (2 * H + E + S)
    zpad = jnp.zeros((TB, pad_w), f32) if pad_w else None   # hoisted out of the loop

    def step(t, carry):
        ch, c = carry                           # ch = [content | h]  (TB, E+H) f32

        # ---- LSTM cell (gate order i, f, g, o); emb part + both biases are in gx. ---
        gates = (gx_ref[t].astype(f32)
                 + jnp.dot(ch.astype(cdt), w_rec_ref[...],
                           preferred_element_type=f32))               # (TB, 4H) f32
        i_g = jax.nn.sigmoid(gates[:, 0:H])
        f_g = jax.nn.sigmoid(gates[:, H:2 * H])
        g_g = jnp.tanh(gates[:, 2 * H:3 * H])
        o_g = jax.nn.sigmoid(gates[:, 3 * H:4 * H])
        c_new = f_g * c + i_g * g_g
        h_new = o_g * jnp.tanh(c_new)

        # ---- Fused (attention query | output-projection h-part): same LHS h_new. ----
        qo = jnp.dot(h_new.astype(cdt), w_qo_ref[...],
                     preferred_element_type=f32)                      # (TB, M+H) f32
        q = qo[:, 0:M]
        oh = qo[:, M:M + H]

        # ---- MLP attention (activations in edt; softmax in f32). ----
        ctxp = ctxp_ref[...]                                          # (TB, S, M) edt
        e = jnp.tanh(q.astype(edt)[:, None, :] + ctxp)                # (TB, S, M) edt
        scores = jnp.sum((e * v_row).astype(f32), axis=-1) + bias     # (TB, S) f32
        m = jnp.max(scores, axis=-1, keepdims=True)
        p_un = jnp.exp(scores - m)
        denom = jnp.sum(p_un, axis=-1, keepdims=True)
        p = p_un * pl.reciprocal(denom, approx=approx_recip)          # softmax(dim=1)

        # content = bmm(p.unsqueeze(1), ctx).squeeze(1): degenerate single-row MXU
        # matmuls -> keep on VPU broadcast-multiply + cross-sublane reduce.
        ctx_c = ctx_ref[...]
        content = jnp.sum(p[:, :, None] * ctx_c, axis=1)              # (TB, E) f32

        # transform_linear (bias=True on the mlp branch); h-part already in `oh`.
        final_h = (oh
                   + jnp.dot(content.astype(cdt), wout_c_ref[...],
                             preferred_element_type=f32)
                   + b_out)                                           # (TB, H) f32

        # Single full-width, lane-dense store per timestep:
        # [raw_h | final_h | content | scores | zero pad].
        parts = [h_new, final_h, content, p]
        if pad_w:
            parts.append(zpad)
        packed_ref[t] = jnp.concatenate(parts, axis=-1)

        return jnp.concatenate([content, h_new], axis=-1), c_new

    carry0 = (ch_ref[...], c_ref[...])
    ch_fin, c_fin = lax.fori_loop(0, TT, step, carry0, unroll=unroll)
    ch_ref[...] = ch_fin
    c_ref[...] = c_fin


def general_decoder_forward(token_ids, context, q_src, params, *,
                            use_bf16=False, attn_bf16=None, approx_recip=None,
                            batch_tile=None, time_tile=None, unroll=4):
    """
    token_ids: (code_step, batch) int32   -- decoder input tokens
    context:   (enc_step, batch, enc_dim) -- encoder states (PyTorch layout)
    q_src:     (enc_step, batch) int32    -- source tokens; PAD positions masked
    Returns (raw_decoder_hidden, out_decoder_hidden, scores, content).

    use_bf16:    bf16 MXU operands (f32 accumulation).
    attn_bf16:   bf16 attention activations (tanh / e*v / ctxp). Default = use_bf16.
                 Set False on v5e (no bf16 VPU/EUP).
    approx_recip: EUP approximate reciprocal in the softmax. Default = use_bf16.
    batch_tile / time_tile: tiling; on v7x pick batch_tile so B//TB >= 2.
    """
    # Glue in plain JAX: embedding gather, layout transposes, hoisted big matmul.
    emb = jnp.take(params['embedding'], token_ids, axis=0)            # (T, B, Ed)
    T, B, Ed = emb.shape
    ctx_bf = jnp.transpose(context, (1, 0, 2))                        # (B, S, E)
    _, S, E = ctx_bf.shape
    H = params['whh_T'].shape[0]
    M = params['win_T'].shape[1]

    cdt = jnp.bfloat16 if use_bf16 else jnp.float32
    edt = jnp.bfloat16 if (use_bf16 if attn_bf16 is None else attn_bf16) else jnp.float32
    approx = use_bf16 if approx_recip is None else approx_recip

    # (1) Hoist the LSTM input-to-hidden projection + both biases: ONE (T*B, Ed) matmul.
    #     Streamed to the kernel in cdt (bf16 on the fast path -> half HBM traffic).
    gx = (emb.reshape(T * B, Ed) @ params['wih_e_T']
          + params['b_lstm']).reshape(T, B, 4 * H).astype(cdt)

    # (2) Additive attention mask bias (0 on valid, -inf on PAD), computed once.
    bias = jnp.where(jnp.transpose(q_src, (1, 0)) == PAD,
                     -jnp.inf, 0.0).astype(jnp.float32)               # (B, S)

    # (3) Fused weights (free concats in the wrapper).
    w_rec = jnp.concatenate([params['wih_c_T'], params['whh_T']], axis=0).astype(cdt)  # (E+H, 4H)
    w_qo = jnp.concatenate([params['win_T'], params['wout_h_T']], axis=1).astype(cdt)  # (H, M+H)
    wctx = params['wctx_T'].astype(cdt)
    wout_c = params['wout_c_T'].astype(cdt)
    b_ctx = params['b_ctx'].astype(jnp.float32)
    v = params['v'].astype(jnp.float32)
    b_out = params['b_out'].astype(jnp.float32)
    ctx_in = ctx_bf.astype(cdt)

    TB = B if batch_tile is None else batch_tile
    TT = T if time_tile is None else time_tile
    assert B % TB == 0 and (TB == B or TB % 8 == 0), "invalid batch tile"
    assert T % TT == 0, "time_tile must divide code_step"
    PACK = _round_up(2 * H + E + S, 128)

    # Partial unroll factor that divides the chunk length (bounded vreg pressure).
    uf = next(u for u in range(max(1, min(unroll, TT)), 0, -1) if TT % u == 0)

    # Explicit VMEM budget (double-buffered streamed blocks + weights + scratch),
    # clamped to be safe on v7x's 64 MiB VMEM.
    def _nbytes(shape, dt):
        n = 1
        for s in shape:
            n *= int(s)
        return n * jnp.dtype(dt).itemsize

    est = (2 * _nbytes((TT, TB, 4 * H), cdt)
           + 2 * _nbytes((TB, S, E), cdt)
           + 2 * _nbytes((TB, S), jnp.float32)
           + 2 * _nbytes((TT, TB, PACK), jnp.float32)
           + 2 * (_nbytes(w_rec.shape, cdt) + _nbytes(w_qo.shape, cdt)
                  + _nbytes(wctx.shape, cdt) + _nbytes(wout_c.shape, cdt)
                  + _nbytes(b_ctx.shape, jnp.float32) + _nbytes(v.shape, jnp.float32)
                  + _nbytes(b_out.shape, jnp.float32))
           + _nbytes((TB, S, M), edt)
           + _nbytes((TB, E + H), jnp.float32) + _nbytes((TB, H), jnp.float32))
    vmem_limit = int(min(max(2 * est + (8 << 20), 32 << 20), 64 << 20))

    def const(arr):
        n = arr.ndim
        return pl.BlockSpec(arr.shape, lambda b, tc, _n=n: (0,) * _n)

    grid_spec = pltpu.PrefetchScalarGridSpec(
        num_scalar_prefetch=0,
        grid=(B // TB, T // TT),                                       # (batch, time-chunk)
        in_specs=[
            pl.BlockSpec((TT, TB, 4 * H), lambda b, tc: (tc, b, 0)),   # gates_x
            pl.BlockSpec((TB, S, E), lambda b, tc: (b, 0, 0)),         # context (batch-first)
            pl.BlockSpec((TB, S), lambda b, tc: (b, 0)),               # mask bias
            const(w_rec), const(w_qo), const(wctx), const(b_ctx), const(v),
            const(wout_c), const(b_out),
        ],
        out_specs=pl.BlockSpec((TT, TB, PACK), lambda b, tc: (tc, b, 0)),
        scratch_shapes=[
            pltpu.VMEM((TB, S, M), edt),             # cached ctx projection
            pltpu.VMEM((TB, E + H), jnp.float32),    # [content | h] carry across chunks
            pltpu.VMEM((TB, H), jnp.float32),        # c carry across chunks
        ],
    )

    kernel = functools.partial(decoder_kernel, approx_recip=approx, unroll=uf)
    packed = pl.pallas_call(
        kernel,
        out_shape=jax.ShapeDtypeStruct((T, B, PACK), jnp.float32),
        grid_spec=grid_spec,
        compiler_params=pltpu.CompilerParams(
            dimension_semantics=("parallel", "arbitrary"),             # megacore over batch
            vmem_limit_bytes=vmem_limit),
    )(gx, ctx_in, bias, w_rec, w_qo, wctx, b_ctx, v, wout_c, b_out)

    # Pad lanes [2H+E+S:PACK] are written as zeros by the kernel and sliced off here.
    raw = packed[:, :, 0:H]
    outh = packed[:, :, H:2 * H]
    cont = packed[:, :, 2 * H:2 * H + E]
    scores = packed[:, :, 2 * H + E:2 * H + E + S]
    return raw, outh, scores, cont


def reference_forward(token_ids, context, q_src, params):
    """Pure-JAX reference mirroring the PyTorch forward semantics (f32)."""
    emb = jnp.take(params['embedding'], token_ids, axis=0)
    ctx = jnp.transpose(context, (1, 0, 2))
    mask = jnp.transpose(q_src, (1, 0)) == PAD
    T, B, _ = emb.shape
    _, S, E = ctx.shape
    H = params['whh_T'].shape[0]
    h = jnp.zeros((B, H), jnp.float32)
    c = jnp.zeros((B, H), jnp.float32)
    cont = jnp.zeros((B, E), jnp.float32)
    ctxp = ctx @ params['wctx_T'] + params['b_ctx']
    raws, outs, scs, conts = [], [], [], []
    for t in range(T):
        gates = (emb[t] @ params['wih_e_T'] + cont @ params['wih_c_T']
                 + h @ params['whh_T'] + params['b_lstm'][0])
        i_g = jax.nn.sigmoid(gates[:, 0:H])
        f_g = jax.nn.sigmoid(gates[:, H:2 * H])
        g_g = jnp.tanh(gates[:, 2 * H:3 * H])
        o_g = jax.nn.sigmoid(gates[:, 3 * H:4 * H])
        c = f_g * c + i_g * g_g
        h = o_g * jnp.tanh(c)
        q = h @ params['win_T']
        e = jnp.tanh(q[:, None, :] + ctxp)
        scores = jnp.sum(e * params['v'], axis=-1)
        scores = jnp.where(mask, -jnp.inf, scores)
        p = jax.nn.softmax(scores, axis=-1)
        cont = jnp.sum(p[:, :, None] * ctx, axis=1)
        fh = h @ params['wout_h_T'] + cont @ params['wout_c_T'] + params['b_out'][0]
        raws.append(h); outs.append(fh); scs.append(p); conts.append(cont)
    return (jnp.stack(raws), jnp.stack(outs), jnp.stack(scs), jnp.stack(conts))


if __name__ == "__main__":
    key = jax.random.PRNGKey(0)
    vocab, emb_dim = 50, 32
    enc_dim, dec_dim = 32, 32           # encoder_hidden_dim, decoder_hidden_dim
    B, T, S = 2, 6, 8                   # batch, code_step, encoder_step
    M = dec_dim                         # attn matrix dim (attn_hidden_dim=None)

    ks = jax.random.split(key, 16)

    def w(k, shape, scale=0.1):
        return (scale * jax.random.normal(k, shape)).astype(jnp.float32)

    params = {
        'embedding': w(ks[0], (vocab, emb_dim)),
        # LSTM: input = [emb ; content]  (word_vec_size = emb_dim + enc_dim)
        'wih_e_T':  w(ks[1], (emb_dim, 4 * dec_dim)),
        'wih_c_T':  w(ks[2], (enc_dim, 4 * dec_dim)),
        'whh_T':    w(ks[3], (dec_dim, 4 * dec_dim)),
        'b_lstm':   w(ks[4], (1, 4 * dec_dim)),          # b_ih + b_hh combined
        # MLP attention
        'win_T':    w(ks[5], (dec_dim, M)),              # input_matrix (no bias)
        'wctx_T':   w(ks[6], (enc_dim, M)),              # ctx_matrix
        'b_ctx':    w(ks[7], (1, 1, M)),
        'v':        w(ks[8], (1, 1, M)),                 # v (no bias)
        # transform_linear (bias=True for mlp)
        'wout_h_T': w(ks[9], (dec_dim, dec_dim)),
        'wout_c_T': w(ks[10], (enc_dim, dec_dim)),
        'b_out':    w(ks[11], (1, dec_dim)),
    }

    token_ids = jax.random.randint(ks[12], (T, B), 1, vocab)
    context = w(ks[13], (S, B, enc_dim), scale=1.0)
    q_src = jax.random.randint(ks[14], (S, B), 1, vocab)
    q_src = q_src.at[S - 2:, 1].set(PAD)                 # pad tail of batch item 1

    refs = reference_forward(token_ids, context, q_src, params)
    names = ("raw_decoder_hidden", "out_decoder_hidden", "scores", "content")

    # Strict check: f32 everywhere, exact reciprocal, time-chunked grid (TT=3)
    # to exercise the cross-chunk h/c/content carry.
    outs = jax.block_until_ready(
        general_decoder_forward(token_ids, context, q_src, params,
                                use_bf16=False, approx_recip=False, time_tile=3))
    for name, o, r in zip(names, outs, refs):
        assert o.shape == r.shape, (name, o.shape, r.shape)
        err = float(jnp.max(jnp.abs(o - r)))
        assert jnp.allclose(o, r, atol=2e-4, rtol=2e-4), (name, err)

    # Fast-path sanity check: bf16 MXU operands + bf16 attention activations +
    # approx reciprocal (v6e/v7x configuration), single time chunk.
    outs_bf = jax.block_until_ready(
        general_decoder_forward(token_ids, context, q_src, params, use_bf16=True))
    for name, o, r in zip(names, outs_bf, refs):
        assert o.shape == r.shape, (name, o.shape, r.shape)
        err = float(jnp.max(jnp.abs(o - r)))
        assert bool(jnp.all(jnp.isfinite(o))), (name, "non-finite")
        assert jnp.allclose(o, r, atol=1e-1, rtol=1e-1), (name, err)

    print("KERNEL_OK")
</pallas_src>

<mosaic_0001>
module attributes {stable_mosaic.version = 11 : i64} {
  func.func @decoder_kernel(%arg0: i32, %arg1: i32, %arg2: memref<3x2x128xf32, #tpu.memory_space<vmem>>, %arg3: memref<2x8x32xf32, #tpu.memory_space<vmem>>, %arg4: memref<2x8xf32, #tpu.memory_space<vmem>>, %arg5: memref<64x128xf32, #tpu.memory_space<vmem>>, %arg6: memref<32x64xf32, #tpu.memory_space<vmem>>, %arg7: memref<32x32xf32, #tpu.memory_space<vmem>>, %arg8: memref<1x1x32xf32, #tpu.memory_space<vmem>>, %arg9: memref<1x1x32xf32, #tpu.memory_space<vmem>>, %arg10: memref<32x32xf32, #tpu.memory_space<vmem>>, %arg11: memref<1x32xf32, #tpu.memory_space<vmem>>, %arg12: memref<3x2x128xf32, #tpu.memory_space<vmem>>, %arg13: memref<2x8x32xf32, #tpu.memory_space<vmem>>, %arg14: memref<2x64xf32, #tpu.memory_space<vmem>>, %arg15: memref<2x32xf32, #tpu.memory_space<vmem>>) attributes {dimension_semantics = [#tpu.dimension_semantics<parallel>, #tpu.dimension_semantics<arbitrary>], iteration_bounds = array<i64: 1, 2>, scalar_prefetch = 0 : i64, scratch_operands = 3 : i64, tpu.core_type = #tpu.core_type<tc>, window_params = [{transform_indices = @transform_0, window_bounds = array<i64: 3, 2, 128>}, {transform_indices = @transform_1, window_bounds = array<i64: 2, 8, 32>}, {transform_indices = @transform_2, window_bounds = array<i64: 2, 8>}, {pipeline_mode = #tpu.pipeline_mode<synchronous>, transform_indices = @transform_3, window_bounds = array<i64: 64, 128>}, {pipeline_mode = #tpu.pipeline_mode<synchronous>, transform_indices = @transform_4, window_bounds = array<i64: 32, 64>}, {pipeline_mode = #tpu.pipeline_mode<synchronous>, transform_indices = @transform_5, window_bounds = array<i64: 32, 32>}, {pipeline_mode = #tpu.pipeline_mode<synchronous>, transform_indices = @transform_6, window_bounds = array<i64: 1, 1, 32>}, {pipeline_mode = #tpu.pipeline_mode<synchronous>, transform_indices = @transform_7, window_bounds = array<i64: 1, 1, 32>}, {pipeline_mode = #tpu.pipeline_mode<synchronous>, transform_indices = @transform_8, window_bounds = array<i64: 32, 32>}, {pipeline_mode = #tpu.pipeline_mode<synchronous>, transform_indices = @transform_9, window_bounds = array<i64: 1, 32>}, {transform_indices = @transform_10, window_bounds = array<i64: 3, 2, 128>}]} {
    %c0_i32 = arith.constant 0 : i32
    %0 = arith.cmpi eq, %arg1, %c0_i32 : i32
    %1 = arith.extui %0 : i1 to i32
    %c0_i32_0 = arith.constant 0 : i32
    %2 = arith.cmpi ne, %1, %c0_i32_0 : i32
    scf.if %2 {
      %cst_94 = arith.constant 0.000000e+00 : f32
      %221 = vector.broadcast %cst_94 : f32 to vector<2x64xf32>
      %c0_95 = arith.constant 0 : index
      %c0_96 = arith.constant 0 : index
      %222 = vector.load %arg14[%c0_95, %c0_96] : memref<2x64xf32, #tpu.memory_space<vmem>>, vector<2x64xf32>
      tpu.vector_store %arg14[%c0_95, %c0_96], %221 {strides = array<i32>} : memref<2x64xf32, #tpu.memory_space<vmem>>, vector<2x64xf32>,
      %cst_97 = arith.constant 0.000000e+00 : f32
      %223 = vector.broadcast %cst_97 : f32 to vector<2x32xf32>
      %c0_98 = arith.constant 0 : index
      %c0_99 = arith.constant 0 : index
      %224 = vector.load %arg15[%c0_98, %c0_99] : memref<2x32xf32, #tpu.memory_space<vmem>>, vector<2x32xf32>
      tpu.vector_store %arg15[%c0_98, %c0_99], %223 {strides = array<i32>} : memref<2x32xf32, #tpu.memory_space<vmem>>, vector<2x32xf32>,
      %c0_100 = arith.constant 0 : index
      %c0_101 = arith.constant 0 : index
      %c0_102 = arith.constant 0 : index
      %225 = vector.load %arg3[%c0_100, %c0_101, %c0_102] : memref<2x8x32xf32, #tpu.memory_space<vmem>>, vector<2x8x32xf32>
      %226 = vector.shape_cast %225 : vector<2x8x32xf32> to vector<16x32xf32>
      %c0_103 = arith.constant 0 : index
      %c0_104 = arith.constant 0 : index
      %227 = vector.load %arg7[%c0_103, %c0_104] : memref<32x32xf32, #tpu.memory_space<vmem>>, vector<32x32xf32>
      %cst_105 = arith.constant dense<0.000000e+00> : vector<16x32xf32>
      %228 = tpu.matmul %226, %227, %cst_105 {dimension_numbers = #tpu.dot_dimension_numbers<[1], [0], [0], [1], [0, 0, 1, 1], [], []>} : vector<16x32xf32>, vector<32x32xf32>, vector<16x32xf32> -> vector<16x32xf32>
      %229 = vector.shape_cast %228 : vector<16x32xf32> to vector<2x8x32xf32>
      %c0_106 = arith.constant 0 : index
      %c0_107 = arith.constant 0 : index
      %c0_108 = arith.constant 0 : index
      %230 = vector.load %arg8[%c0_106, %c0_107, %c0_108] : memref<1x1x32xf32, #tpu.memory_space<vmem>>, vector<1x1x32xf32>
      %231 = vector.broadcast %230 : vector<1x1x32xf32> to vector<2x8x32xf32>
      %232 = arith.addf %229, %231 : vector<2x8x32xf32>
      %c0_109 = arith.constant 0 : index
      %c0_110 = arith.constant 0 : index
      %c0_111 = arith.constant 0 : index
      %233 = vector.load %arg13[%c0_109, %c0_110, %c0_111] : memref<2x8x32xf32, #tpu.memory_space<vmem>>, vector<2x8x32xf32>
      tpu.vector_store %arg13[%c0_109, %c0_110, %c0_111], %232 {strides = array<i32>} : memref<2x8x32xf32, #tpu.memory_space<vmem>>, vector<2x8x32xf32>,
    } else {
    }
    %c0 = arith.constant 0 : index
    %c0_1 = arith.constant 0 : index
    %3 = vector.load %arg4[%c0, %c0_1] : memref<2x8xf32, #tpu.memory_space<vmem>>, vector<2x8xf32>
    %c0_2 = arith.constant 0 : index
    %c0_3 = arith.constant 0 : index
    %c0_4 = arith.constant 0 : index
    %4 = vector.load %arg9[%c0_2, %c0_3, %c0_4] : memref<1x1x32xf32, #tpu.memory_space<vmem>>, vector<1x1x32xf32>
    %c0_5 = arith.constant 0 : index
    %c0_6 = arith.constant 0 : index
    %5 = vector.load %arg11[%c0_5, %c0_6] : memref<1x32xf32, #tpu.memory_space<vmem>>, vector<1x32xf32>
    %cst = arith.constant 0.000000e+00 : f32
    %6 = vector.broadcast %cst : f32 to vector<2x24xf32>
    %c0_7 = arith.constant 0 : index
    %c0_8 = arith.constant 0 : index
    %7 = vector.load %arg14[%c0_7, %c0_8] : memref<2x64xf32, #tpu.memory_space<vmem>>, vector<2x64xf32>
    %c0_9 = arith.constant 0 : index
    %c0_10 = arith.constant 0 : index
    %8 = vector.load %arg15[%c0_9, %c0_10] : memref<2x32xf32, #tpu.memory_space<vmem>>, vector<2x32xf32>
    %c0_i32_11 = arith.constant 0 : i32
    %9 = arith.index_cast %c0_i32_11 : i32 to index
    %c0_12 = arith.constant 0 : index
    %c0_13 = arith.constant 0 : index
    %10 = vector.load %arg2[%9, %c0_12, %c0_13] : memref<3x2x128xf32, #tpu.memory_space<vmem>>, vector<1x2x128xf32>
    %11 = vector.shape_cast %10 : vector<1x2x128xf32> to vector<2x128xf32>
    %c0_14 = arith.constant 0 : index
    %c0_15 = arith.constant 0 : index
    %12 = vector.load %arg5[%c0_14, %c0_15] : memref<64x128xf32, #tpu.memory_space<vmem>>, vector<64x128xf32>
    %cst_16 = arith.constant dense<0.000000e+00> : vector<2x128xf32>
    %13 = tpu.matmul %7, %12, %cst_16 {dimension_numbers = #tpu.dot_dimension_numbers<[1], [0], [0], [1], [0, 0, 1, 1], [], []>} : vector<2x64xf32>, vector<64x128xf32>, vector<2x128xf32> -> vector<2x128xf32>
    %14 = arith.addf %11, %13 : vector<2x128xf32>
    %15 = vector.extract_strided_slice %14 {offsets = [0, 0], sizes = [2, 32], strides = [1, 1]} : vector<2x128xf32> to vector<2x32xf32>
    %16 = arith.negf %15 : vector<2x32xf32>
    %17 = math.exp %16 : vector<2x32xf32>
    %cst_17 = arith.constant 1.000000e+00 : f32
    %18 = vector.broadcast %cst_17 : f32 to vector<2x32xf32>
    %19 = arith.addf %18, %17 : vector<2x32xf32>
    %20 = arith.divf %18, %19 : vector<2x32xf32>
    %21 = vector.extract_strided_slice %14 {offsets = [0, 32], sizes = [2, 32], strides = [1, 1]} : vector<2x128xf32> to vector<2x32xf32>
    %22 = arith.negf %21 : vector<2x32xf32>
    %23 = math.exp %22 : vector<2x32xf32>
    %cst_18 = arith.constant 1.000000e+00 : f32
    %24 = vector.broadcast %cst_18 : f32 to vector<2x32xf32>
    %25 = arith.addf %24, %23 : vector<2x32xf32>
    %26 = arith.divf %24, %25 : vector<2x32xf32>
    %27 = vector.extract_strided_slice %14 {offsets = [0, 64], sizes = [2, 32], strides = [1, 1]} : vector<2x128xf32> to vector<2x32xf32>
    %28 = math.tanh %27 : vector<2x32xf32>
    %29 = vector.extract_strided_slice %14 {offsets = [0, 96], sizes = [2, 32], strides = [1, 1]} : vector<2x128xf32> to vector<2x32xf32>
    %30 = arith.negf %29 : vector<2x32xf32>
    %31 = math.exp %30 : vector<2x32xf32>
    %cst_19 = arith.constant 1.000000e+00 : f32
    %32 = vector.broadcast %cst_19 : f32 to vector<2x32xf32>
    %33 = arith.addf %32, %31 : vector<2x32xf32>
    %34 = arith.divf %32, %33 : vector<2x32xf32>
    %35 = arith.mulf %26, %8 : vector<2x32xf32>
    %36 = arith.mulf %20, %28 : vector<2x32xf32>
    %37 = arith.addf %35, %36 : vector<2x32xf32>
    %38 = math.tanh %37 : vector<2x32xf32>
    %39 = arith.mulf %34, %38 : vector<2x32xf32>
    %c0_20 = arith.constant 0 : index
    %c0_21 = arith.constant 0 : index
    %40 = vector.load %arg6[%c0_20, %c0_21] : memref<32x64xf32, #tpu.memory_space<vmem>>, vector<32x64xf32>
    %cst_22 = arith.constant dense<0.000000e+00> : vector<2x64xf32>
    %41 = tpu.matmul %39, %40, %cst_22 {dimension_numbers = #tpu.dot_dimension_numbers<[1], [0], [0], [1], [0, 0, 1, 1], [], []>} : vector<2x32xf32>, vector<32x64xf32>, vector<2x64xf32> -> vector<2x64xf32>
    %42 = vector.extract_strided_slice %41 {offsets = [0, 0], sizes = [2, 32], strides = [1, 1]} : vector<2x64xf32> to vector<2x32xf32>
    %43 = vector.extract_strided_slice %41 {offsets = [0, 32], sizes = [2, 32], strides = [1, 1]} : vector<2x64xf32> to vector<2x32xf32>
    %c0_23 = arith.constant 0 : index
    %c0_24 = arith.constant 0 : index
    %c0_25 = arith.constant 0 : index
    %44 = vector.load %arg13[%c0_23, %c0_24, %c0_25] : memref<2x8x32xf32, #tpu.memory_space<vmem>>, vector<2x8x32xf32>
    %45 = vector.shape_cast %42 : vector<2x32xf32> to vector<2x1x32xf32>
    %46 = vector.broadcast %45 : vector<2x1x32xf32> to vector<2x8x32xf32>
    %47 = arith.addf %46, %44 : vector<2x8x32xf32>
    %48 = math.tanh %47 : vector<2x8x32xf32>
    %49 = vector.broadcast %4 : vector<1x1x32xf32> to vector<2x8x32xf32>
    %50 = arith.mulf %48, %49 : vector<2x8x32xf32>
    %cst_26 = arith.constant dense<0.000000e+00> : vector<2x8xf32>
    %51 = vector.multi_reduction <add>, %50, %cst_26 [2] : vector<2x8x32xf32> to vector<2x8xf32>
    %52 = arith.addf %51, %3 : vector<2x8xf32>
    %cst_27 = arith.constant dense<0xFF800000> : vector<2xf32>
    %53 = vector.multi_reduction <maximumf>, %52, %cst_27 [1] : vector<2x8xf32> to vector<2xf32>
    %54 = vector.shape_cast %53 : vector<2xf32> to vector<2x1xf32>
    %55 = vector.broadcast %54 : vector<2x1xf32> to vector<2x8xf32>
    %56 = arith.subf %52, %55 : vector<2x8xf32>
    %57 = math.exp %56 : vector<2x8xf32>
    %cst_28 = arith.constant dense<0.000000e+00> : vector<2xf32>
    %58 = vector.multi_reduction <add>, %57, %cst_28 [1] : vector<2x8xf32> to vector<2xf32>
    %59 = vector.shape_cast %58 : vector<2xf32> to vector<2x1xf32>
    %60 = tpu.reciprocal %59 : vector<2x1xf32> -> vector<2x1xf32>
    %61 = vector.broadcast %60 : vector<2x1xf32> to vector<2x8xf32>
    %62 = arith.mulf %57, %61 : vector<2x8xf32>
    %c0_29 = arith.constant 0 : index
    %c0_30 = arith.constant 0 : index
    %c0_31 = arith.constant 0 : index
    %63 = vector.load %arg3[%c0_29, %c0_30, %c0_31] : memref<2x8x32xf32, #tpu.memory_space<vmem>>, vector<2x8x32xf32>
    %64 = vector.shape_cast %62 : vector<2x8xf32> to vector<2x8x1xf32>
    %65 = vector.broadcast %64 : vector<2x8x1xf32> to vector<2x8x32xf32>
    %66 = arith.mulf %65, %63 : vector<2x8x32xf32>
    %cst_32 = arith.constant dense<0.000000e+00> : vector<2x32xf32>
    %67 = vector.multi_reduction <add>, %66, %cst_32 [1] : vector<2x8x32xf32> to vector<2x32xf32>
    %c0_33 = arith.constant 0 : index
    %c0_34 = arith.constant 0 : index
    %68 = vector.load %arg10[%c0_33, %c0_34] : memref<32x32xf32, #tpu.memory_space<vmem>>, vector<32x32xf32>
    %cst_35 = arith.constant dense<0.000000e+00> : vector<2x32xf32>
    %69 = tpu.matmul %67, %68, %cst_35 {dimension_numbers = #tpu.dot_dimension_numbers<[1], [0], [0], [1], [0, 0, 1, 1], [], []>} : vector<2x32xf32>, vector<32x32xf32>, vector<2x32xf32> -> vector<2x32xf32>
    %70 = arith.addf %43, %69 : vector<2x32xf32>
    %71 = vector.broadcast %5 : vector<1x32xf32> to vector<2x32xf32>
    %72 = arith.addf %70, %71 : vector<2x32xf32>
    %73 = tpu.concatenate %39, %72, %67, %62, %6 in 1 : vector<2x32xf32>, vector<2x32xf32>, vector<2x32xf32>, vector<2x8xf32>, vector<2x24xf32> -> vector<2x128xf32>
    %74 = arith.index_cast %c0_i32_11 : i32 to index
    %c0_36 = arith.constant 0 : index
    %c0_37 = arith.constant 0 : index
    %75 = vector.load %arg12[%74, %c0_36, %c0_37] : memref<3x2x128xf32, #tpu.memory_space<vmem>>, vector<1x2x128xf32>
    %76 = vector.shape_cast %75 : vector<1x2x128xf32> to vector<2x128xf32>
    %77 = vector.shape_cast %73 : vector<2x128xf32> to vector<1x2x128xf32>
    tpu.vector_store %arg12[%74, %c0_36, %c0_37], %77 {strides = array<i32>} : memref<3x2x128xf32, #tpu.memory_space<vmem>>, vector<1x2x128xf32>,
    %78 = tpu.concatenate %67, %39 in 1 : vector<2x32xf32>, vector<2x32xf32> -> vector<2x64xf32>
    %c1_i32 = arith.constant 1 : i32
    %79 = arith.index_cast %c1_i32 : i32 to index
    %c0_38 = arith.constant 0 : index
    %c0_39 = arith.constant 0 : index
    %80 = vector.load %arg2[%79, %c0_38, %c0_39] : memref<3x2x128xf32, #tpu.memory_space<vmem>>, vector<1x2x128xf32>
    %81 = vector.shape_cast %80 : vector<1x2x128xf32> to vector<2x128xf32>
    %c0_40 = arith.constant 0 : index
    %c0_41 = arith.constant 0 : index
    %82 = vector.load %arg5[%c0_40, %c0_41] : memref<64x128xf32, #tpu.memory_space<vmem>>, vector<64x128xf32>
    %cst_42 = arith.constant dense<0.000000e+00> : vector<2x128xf32>
    %83 = tpu.matmul %78, %82, %cst_42 {dimension_numbers = #tpu.dot_dimension_numbers<[1], [0], [0], [1], [0, 0, 1, 1], [], []>} : vector<2x64xf32>, vector<64x128xf32>, vector<2x128xf32> -> vector<2x128xf32>
    %84 = arith.addf %81, %83 : vector<2x128xf32>
    %85 = vector.extract_strided_slice %84 {offsets = [0, 0], sizes = [2, 32], strides = [1, 1]} : vector<2x128xf32> to vector<2x32xf32>
    %86 = arith.negf %85 : vector<2x32xf32>
    %87 = math.exp %86 : vector<2x32xf32>
    %cst_43 = arith.constant 1.000000e+00 : f32
    %88 = vector.broadcast %cst_43 : f32 to vector<2x32xf32>
    %89 = arith.addf %88, %87 : vector<2x32xf32>
    %90 = arith.divf %88, %89 : vector<2x32xf32>
    %91 = vector.extract_strided_slice %84 {offsets = [0, 32], sizes = [2, 32], strides = [1, 1]} : vector<2x128xf32> to vector<2x32xf32>
    %92 = arith.negf %91 : vector<2x32xf32>
    %93 = math.exp %92 : vector<2x32xf32>
    %cst_44 = arith.constant 1.000000e+00 : f32
    %94 = vector.broadcast %cst_44 : f32 to vector<2x32xf32>
    %95 = arith.addf %94, %93 : vector<2x32xf32>
    %96 = arith.divf %94, %95 : vector<2x32xf32>
    %97 = vector.extract_strided_slice %84 {offsets = [0, 64], sizes = [2, 32], strides = [1, 1]} : vector<2x128xf32> to vector<2x32xf32>
    %98 = math.tanh %97 : vector<2x32xf32>
    %99 = vector.extract_strided_slice %84 {offsets = [0, 96], sizes = [2, 32], strides = [1, 1]} : vector<2x128xf32> to vector<2x32xf32>
    %100 = arith.negf %99 : vector<2x32xf32>
    %101 = math.exp %100 : vector<2x32xf32>
    %cst_45 = arith.constant 1.000000e+00 : f32
    %102 = vector.broadcast %cst_45 : f32 to vector<2x32xf32>
    %103 = arith.addf %102, %101 : vector<2x32xf32>
    %104 = arith.divf %102, %103 : vector<2x32xf32>
    %105 = arith.mulf %96, %37 : vector<2x32xf32>
    %106 = arith.mulf %90, %98 : vector<2x32xf32>
    %107 = arith.addf %105, %106 : vector<2x32xf32>
    %108 = math.tanh %107 : vector<2x32xf32>
    %109 = arith.mulf %104, %108 : vector<2x32xf32>
    %c0_46 = arith.constant 0 : index
    %c0_47 = arith.constant 0 : index
    %110 = vector.load %arg6[%c0_46, %c0_47] : memref<32x64xf32, #tpu.memory_space<vmem>>, vector<32x64xf32>
    %cst_48 = arith.constant dense<0.000000e+00> : vector<2x64xf32>
    %111 = tpu.matmul %109, %110, %cst_48 {dimension_numbers = #tpu.dot_dimension_numbers<[1], [0], [0], [1], [0, 0, 1, 1], [], []>} : vector<2x32xf32>, vector<32x64xf32>, vector<2x64xf32> -> vector<2x64xf32>
    %112 = vector.extract_strided_slice %111 {offsets = [0, 0], sizes = [2, 32], strides = [1, 1]} : vector<2x64xf32> to vector<2x32xf32>
    %113 = vector.extract_strided_slice %111 {offsets = [0, 32], sizes = [2, 32], strides = [1, 1]} : vector<2x64xf32> to vector<2x32xf32>
    %c0_49 = arith.constant 0 : index
    %c0_50 = arith.constant 0 : index
    %c0_51 = arith.constant 0 : index
    %114 = vector.load %arg13[%c0_49, %c0_50, %c0_51] : memref<2x8x32xf32, #tpu.memory_space<vmem>>, vector<2x8x32xf32>
    %115 = vector.shape_cast %112 : vector<2x32xf32> to vector<2x1x32xf32>
    %116 = vector.broadcast %115 : vector<2x1x32xf32> to vector<2x8x32xf32>
    %117 = arith.addf %116, %114 : vector<2x8x32xf32>
    %118 = math.tanh %117 : vector<2x8x32xf32>
    %119 = vector.broadcast %4 : vector<1x1x32xf32> to vector<2x8x32xf32>
    %120 = arith.mulf %118, %119 : vector<2x8x32xf32>
    %cst_52 = arith.constant dense<0.000000e+00> : vector<2x8xf32>
    %121 = vector.multi_reduction <add>, %120, %cst_52 [2] : vector<2x8x32xf32> to vector<2x8xf32>
    %122 = arith.addf %121, %3 : vector<2x8xf32>
    %cst_53 = arith.constant dense<0xFF800000> : vector<2xf32>
    %123 = vector.multi_reduction <maximumf>, %122, %cst_53 [1] : vector<2x8xf32> to vector<2xf32>
    %124 = vector.shape_cast %123 : vector<2xf32> to vector<2x1xf32>
    %125 = vector.broadcast %124 : vector<2x1xf32> to vector<2x8xf32>
    %126 = arith.subf %122, %125 : vector<2x8xf32>
    %127 = math.exp %126 : vector<2x8xf32>
    %cst_54 = arith.constant dense<0.000000e+00> : vector<2xf32>
    %128 = vector.multi_reduction <add>, %127, %cst_54 [1] : vector<2x8xf32> to vector<2xf32>
    %129 = vector.shape_cast %128 : vector<2xf32> to vector<2x1xf32>
    %130 = tpu.reciprocal %129 : vector<2x1xf32> -> vector<2x1xf32>
    %131 = vector.broadcast %130 : vector<2x1xf32> to vector<2x8xf32>
    %132 = arith.mulf %127, %131 : vector<2x8xf32>
    %c0_55 = arith.constant 0 : index
    %c0_56 = arith.constant 0 : index
    %c0_57 = arith.constant 0 : index
    %133 = vector.load %arg3[%c0_55, %c0_56, %c0_57] : memref<2x8x32xf32, #tpu.memory_space<vmem>>, vector<2x8x32xf32>
    %134 = vector.shape_cast %132 : vector<2x8xf32> to vector<2x8x1xf32>
    %135 = vector.broadcast %134 : vector<2x8x1xf32> to vector<2x8x32xf32>
    %136 = arith.mulf %135, %133 : vector<2x8x32xf32>
    %cst_58 = arith.constant dense<0.000000e+00> : vector<2x32xf32>
    %137 = vector.multi_reduction <add>, %136, %cst_58 [1] : vector<2x8x32xf32> to vector<2x32xf32>
    %c0_59 = arith.constant 0 : index
    %c0_60 = arith.constant 0 : index
    %138 = vector.load %arg10[%c0_59, %c0_60] : memref<32x32xf32, #tpu.memory_space<vmem>>, vector<32x32xf32>
    %cst_61 = arith.constant dense<0.000000e+00> : vector<2x32xf32>
    %139 = tpu.matmul %137, %138, %cst_61 {dimension_numbers = #tpu.dot_dimension_numbers<[1], [0], [0], [1], [0, 0, 1, 1], [], []>} : vector<2x32xf32>, vector<32x32xf32>, vector<2x32xf32> -> vector<2x32xf32>
    %140 = arith.addf %113, %139 : vector<2x32xf32>
    %141 = vector.broadcast %5 : vector<1x32xf32> to vector<2x32xf32>
    %142 = arith.addf %140, %141 : vector<2x32xf32>
    %143 = tpu.concatenate %109, %142, %137, %132, %6 in 1 : vector<2x32xf32>, vector<2x32xf32>, vector<2x32xf32>, vector<2x8xf32>, vector<2x24xf32> -> vector<2x128xf32>
    %144 = arith.index_cast %c1_i32 : i32 to index
    %c0_62 = arith.constant 0 : index
    %c0_63 = arith.constant 0 : index
    %145 = vector.load %arg12[%144, %c0_62, %c0_63] : memref<3x2x128xf32, #tpu.memory_space<vmem>>, vector<1x2x128xf32>
    %146 = vector.shape_cast %145 : vector<1x2x128xf32> to vector<2x128xf32>
    %147 = vector.shape_cast %143 : vector<2x128xf32> to vector<1x2x128xf32>
    tpu.vector_store %arg12[%144, %c0_62, %c0_63], %147 {strides = array<i32>} : memref<3x2x128xf32, #tpu.memory_space<vmem>>, vector<1x2x128xf32>,
    %148 = tpu.concatenate %137, %109 in 1 : vector<2x32xf32>, vector<2x32xf32> -> vector<2x64xf32>
    %c2_i32 = arith.constant 2 : i32
    %149 = arith.index_cast %c2_i32 : i32 to index
    %c0_64 = arith.constant 0 : index
    %c0_65 = arith.constant 0 : index
    %150 = vector.load %arg2[%149, %c0_64, %c0_65] : memref<3x2x128xf32, #tpu.memory_space<vmem>>, vector<1x2x128xf32>
    %151 = vector.shape_cast %150 : vector<1x2x128xf32> to vector<2x128xf32>
    %c0_66 = arith.constant 0 : index
    %c0_67 = arith.constant 0 : index
    %152 = vector.load %arg5[%c0_66, %c0_67] : memref<64x128xf32, #tpu.memory_space<vmem>>, vector<64x128xf32>
    %cst_68 = arith.constant dense<0.000000e+00> : vector<2x128xf32>
    %153 = tpu.matmul %148, %152, %cst_68 {dimension_numbers = #tpu.dot_dimension_numbers<[1], [0], [0], [1], [0, 0, 1, 1], [], []>} : vector<2x64xf32>, vector<64x128xf32>, vector<2x128xf32> -> vector<2x128xf32>
    %154 = arith.addf %151, %153 : vector<2x128xf32>
    %155 = vector.extract_strided_slice %154 {offsets = [0, 0], sizes = [2, 32], strides = [1, 1]} : vector<2x128xf32> to vector<2x32xf32>
    %156 = arith.negf %155 : vector<2x32xf32>
    %157 = math.exp %156 : vector<2x32xf32>
    %cst_69 = arith.constant 1.000000e+00 : f32
    %158 = vector.broadcast %cst_69 : f32 to vector<2x32xf32>
    %159 = arith.addf %158, %157 : vector<2x32xf32>
    %160 = arith.divf %158, %159 : vector<2x32xf32>
    %161 = vector.extract_strided_slice %154 {offsets = [0, 32], sizes = [2, 32], strides = [1, 1]} : vector<2x128xf32> to vector<2x32xf32>
    %162 = arith.negf %161 : vector<2x32xf32>
    %163 = math.exp %162 : vector<2x32xf32>
    %cst_70 = arith.constant 1.000000e+00 : f32
    %164 = vector.broadcast %cst_70 : f32 to vector<2x32xf32>
    %165 = arith.addf %164, %163 : vector<2x32xf32>
    %166 = arith.divf %164, %165 : vector<2x32xf32>
    %167 = vector.extract_strided_slice %154 {offsets = [0, 64], sizes = [2, 32], strides = [1, 1]} : vector<2x128xf32> to vector<2x32xf32>
    %168 = math.tanh %167 : vector<2x32xf32>
    %169 = vector.extract_strided_slice %154 {offsets = [0, 96], sizes = [2, 32], strides = [1, 1]} : vector<2x128xf32> to vector<2x32xf32>
    %170 = arith.negf %169 : vector<2x32xf32>
    %171 = math.exp %170 : vector<2x32xf32>
    %cst_71 = arith.constant 1.000000e+00 : f32
    %172 = vector.broadcast %cst_71 : f32 to vector<2x32xf32>
    %173 = arith.addf %172, %171 : vector<2x32xf32>
    %174 = arith.divf %172, %173 : vector<2x32xf32>
    %175 = arith.mulf %166, %107 : vector<2x32xf32>
    %176 = arith.mulf %160, %168 : vector<2x32xf32>
    %177 = arith.addf %175, %176 : vector<2x32xf32>
    %178 = math.tanh %177 : vector<2x32xf32>
    %179 = arith.mulf %174, %178 : vector<2x32xf32>
    %c0_72 = arith.constant 0 : index
    %c0_73 = arith.constant 0 : index
    %180 = vector.load %arg6[%c0_72, %c0_73] : memref<32x64xf32, #tpu.memory_space<vmem>>, vector<32x64xf32>
    %cst_74 = arith.constant dense<0.000000e+00> : vector<2x64xf32>
    %181 = tpu.matmul %179, %180, %cst_74 {dimension_numbers = #tpu.dot_dimension_numbers<[1], [0], [0], [1], [0, 0, 1, 1], [], []>} : vector<2x32xf32>, vector<32x64xf32>, vector<2x64xf32> -> vector<2x64xf32>
    %182 = vector.extract_strided_slice %181 {offsets = [0, 0], sizes = [2, 32], strides = [1, 1]} : vector<2x64xf32> to vector<2x32xf32>
    %183 = vector.extract_strided_slice %181 {offsets = [0, 32], sizes = [2, 32], strides = [1, 1]} : vector<2x64xf32> to vector<2x32xf32>
    %c0_75 = arith.constant 0 : index
    %c0_76 = arith.constant 0 : index
    %c0_77 = arith.constant 0 : index
    %184 = vector.load %arg13[%c0_75, %c0_76, %c0_77] : memref<2x8x32xf32, #tpu.memory_space<vmem>>, vector<2x8x32xf32>
    %185 = vector.shape_cast %182 : vector<2x32xf32> to vector<2x1x32xf32>
    %186 = vector.broadcast %185 : vector<2x1x32xf32> to vector<2x8x32xf32>
    %187 = arith.addf %186, %184 : vector<2x8x32xf32>
    %188 = math.tanh %187 : vector<2x8x32xf32>
    %189 = vector.broadcast %4 : vector<1x1x32xf32> to vector<2x8x32xf32>
    %190 = arith.mulf %188, %189 : vector<2x8x32xf32>
    %cst_78 = arith.constant dense<0.000000e+00> : vector<2x8xf32>
    %191 = vector.multi_reduction <add>, %190, %cst_78 [2] : vector<2x8x32xf32> to vector<2x8xf32>
    %192 = arith.addf %191, %3 : vector<2x8xf32>
    %cst_79 = arith.constant dense<0xFF800000> : vector<2xf32>
    %193 = vector.multi_reduction <maximumf>, %192, %cst_79 [1] : vector<2x8xf32> to vector<2xf32>
    %194 = vector.shape_cast %193 : vector<2xf32> to vector<2x1xf32>
    %195 = vector.broadcast %194 : vector<2x1xf32> to vector<2x8xf32>
    %196 = arith.subf %192, %195 : vector<2x8xf32>
    %197 = math.exp %196 : vector<2x8xf32>
    %cst_80 = arith.constant dense<0.000000e+00> : vector<2xf32>
    %198 = vector.multi_reduction <add>, %197, %cst_80 [1] : vector<2x8xf32> to vector<2xf32>
    %199 = vector.shape_cast %198 : vector<2xf32> to vector<2x1xf32>
    %200 = tpu.reciprocal %199 : vector<2x1xf32> -> vector<2x1xf32>
    %201 = vector.broadcast %200 : vector<2x1xf32> to vector<2x8xf32>
    %202 = arith.mulf %197, %201 : vector<2x8xf32>
    %c0_81 = arith.constant 0 : index
    %c0_82 = arith.constant 0 : index
    %c0_83 = arith.constant 0 : index
    %203 = vector.load %arg3[%c0_81, %c0_82, %c0_83] : memref<2x8x32xf32, #tpu.memory_space<vmem>>, vector<2x8x32xf32>
    %204 = vector.shape_cast %202 : vector<2x8xf32> to vector<2x8x1xf32>
    %205 = vector.broadcast %204 : vector<2x8x1xf32> to vector<2x8x32xf32>
    %206 = arith.mulf %205, %203 : vector<2x8x32xf32>
    %cst_84 = arith.constant dense<0.000000e+00> : vector<2x32xf32>
    %207 = vector.multi_reduction <add>, %206, %cst_84 [1] : vector<2x8x32xf32> to vector<2x32xf32>
    %c0_85 = arith.constant 0 : index
    %c0_86 = arith.constant 0 : index
    %208 = vector.load %arg10[%c0_85, %c0_86] : memref<32x32xf32, #tpu.memory_space<vmem>>, vector<32x32xf32>
    %cst_87 = arith.constant dense<0.000000e+00> : vector<2x32xf32>
    %209 = tpu.matmul %207, %208, %cst_87 {dimension_numbers = #tpu.dot_dimension_numbers<[1], [0], [0], [1], [0, 0, 1, 1], [], []>} : vector<2x32xf32>, vector<32x32xf32>, vector<2x32xf32> -> vector<2x32xf32>
    %210 = arith.addf %183, %209 : vector<2x32xf32>
    %211 = vector.broadcast %5 : vector<1x32xf32> to vector<2x32xf32>
    %212 = arith.addf %210, %211 : vector<2x32xf32>
    %213 = tpu.concatenate %179, %212, %207, %202, %6 in 1 : vector<2x32xf32>, vector<2x32xf32>, vector<2x32xf32>, vector<2x8xf32>, vector<2x24xf32> -> vector<2x128xf32>
    %214 = arith.index_cast %c2_i32 : i32 to index
    %c0_88 = arith.constant 0 : index
    %c0_89 = arith.constant 0 : index
    %215 = vector.load %arg12[%214, %c0_88, %c0_89] : memref<3x2x128xf32, #tpu.memory_space<vmem>>, vector<1x2x128xf32>
    %216 = vector.shape_cast %215 : vector<1x2x128xf32> to vector<2x128xf32>
    %217 = vector.shape_cast %213 : vector<2x128xf32> to vector<1x2x128xf32>
    tpu.vector_store %arg12[%214, %c0_88, %c0_89], %217 {strides = array<i32>} : memref<3x2x128xf32, #tpu.memory_space<vmem>>, vector<1x2x128xf32>,
    %218 = tpu.concatenate %207, %179 in 1 : vector<2x32xf32>, vector<2x32xf32> -> vector<2x64xf32>
    %c3_i32 = arith.constant 3 : i32
    %c0_90 = arith.constant 0 : index
    %c0_91 = arith.constant 0 : index
    %219 = vector.load %arg14[%c0_90, %c0_91] : memref<2x64xf32, #tpu.memory_space<vmem>>, vector<2x64xf32>
    tpu.vector_store %arg14[%c0_90, %c0_91], %218 {strides = array<i32>} : memref<2x64xf32, #tpu.memory_space<vmem>>, vector<2x64xf32>,
    %c0_92 = arith.constant 0 : index
    %c0_93 = arith.constant 0 : index
    %220 = vector.load %arg15[%c0_92, %c0_93] : memref<2x32xf32, #tpu.memory_space<vmem>>, vector<2x32xf32>
    tpu.vector_store %arg15[%c0_92, %c0_93], %177 {strides = array<i32>} : memref<2x32xf32, #tpu.memory_space<vmem>>, vector<2x32xf32>,
    return
  }
  func.func @transform_0(%arg0: i32, %arg1: i32) -> (i32, i32, i32) {
    %c0_i32 = arith.constant 0 : i32
    %c0_i32_0 = arith.constant 0 : i32
    return %arg1, %arg0, %c0_i32 : i32, i32, i32
  }
  func.func @transform_1(%arg0: i32, %arg1: i32) -> (i32, i32, i32) {
    %c0_i32 = arith.constant 0 : i32
    %c0_i32_0 = arith.constant 0 : i32
    %c0_i32_1 = arith.constant 0 : i32
    return %arg0, %c0_i32, %c0_i32_0 : i32, i32, i32
  }
  func.func @transform_2(%arg0: i32, %arg1: i32) -> (i32, i32) {
    %c0_i32 = arith.constant 0 : i32
    %c0_i32_0 = arith.constant 0 : i32
    return %arg0, %c0_i32 : i32, i32
  }
  func.func @transform_3(%arg0: i32, %arg1: i32) -> (i32, i32) {
    %c0_i32 = arith.constant 0 : i32
    %c0_i32_0 = arith.constant 0 : i32
    %c0_i32_1 = arith.constant 0 : i32
    return %c0_i32, %c0_i32_0 : i32, i32
  }
  func.func @transform_4(%arg0: i32, %arg1: i32) -> (i32, i32) {
    %c0_i32 = arith.constant 0 : i32
    %c0_i32_0 = arith.constant 0 : i32
    %c0_i32_1 = arith.constant 0 : i32
    return %c0_i32, %c0_i32_0 : i32, i32
  }
  func.func @transform_5(%arg0: i32, %arg1: i32) -> (i32, i32) {
    %c0_i32 = arith.constant 0 : i32
    %c0_i32_0 = arith.constant 0 : i32
    %c0_i32_1 = arith.constant 0 : i32
    return %c0_i32, %c0_i32_0 : i32, i32
  }
  func.func @transform_6(%arg0: i32, %arg1: i32) -> (i32, i32, i32) {
    %c0_i32 = arith.constant 0 : i32
    %c0_i32_0 = arith.constant 0 : i32
    %c0_i32_1 = arith.constant 0 : i32
    %c0_i32_2 = arith.constant 0 : i32
    return %c0_i32, %c0_i32_0, %c0_i32_1 : i32, i32, i32
  }
  func.func @transform_7(%arg0: i32, %arg1: i32) -> (i32, i32, i32) {
    %c0_i32 = arith.constant 0 : i32
    %c0_i32_0 = arith.constant 0 : i32
    %c0_i32_1 = arith.constant 0 : i32
    %c0_i32_2 = arith.constant 0 : i32
    return %c0_i32, %c0_i32_0, %c0_i32_1 : i32, i32, i32
  }
  func.func @transform_8(%arg0: i32, %arg1: i32) -> (i32, i32) {
    %c0_i32 = arith.constant 0 : i32
    %c0_i32_0 = arith.constant 0 : i32
    %c0_i32_1 = arith.constant 0 : i32
    return %c0_i32, %c0_i32_0 : i32, i32
  }
  func.func @transform_9(%arg0: i32, %arg1: i32) -> (i32, i32) {
    %c0_i32 = arith.constant 0 : i32
    %c0_i32_0 = arith.constant 0 : i32
    %c0_i32_1 = arith.constant 0 : i32
    return %c0_i32, %c0_i32_0 : i32, i32
  }
  func.func @transform_10(%arg0: i32, %arg1: i32) -> (i32, i32, i32) {
    %c0_i32 = arith.constant 0 : i32
    %c0_i32_0 = arith.constant 0 : i32
    return %arg1, %arg0, %c0_i32 : i32, i32, i32
  }
}

</mosaic_0001>

<llo_original>
// kernel: tpu_custom_call.1
$region0: #{tpu_custom_call.1}
  #allocation0 [shape = 'u32[]', space=smem, size = 0x4, offset = 0x4, fixed_abs, tag = 'smem constant byte address 0x4 - core index']
  #allocation1 [shape = 'u32[144,128]{1,0:T(1,128)}', space=vmem, size = 0x12000, scoped, tag = 'internal scratch']
  #allocation2 [shape = 'f32[2,8,32]{2,1,0:T(8,128)}', space=vmem, size = 0x2000, scoped, tag = 'scratch operand']
  #allocation3 [shape = 'f32[2,64]{1,0:T(2,128)}', space=vmem, size = 0x400, scoped, tag = 'scratch operand']
  #allocation4 [shape = 'f32[2,32]{1,0:T(2,128)}', space=vmem, size = 0x400, scoped, tag = 'scratch operand']
  %s0 = inlined_call_operand.hbm [shape: f32[6,2,128], index: 0, kind: input, shape index: {}]
  %s1 = inlined_call_operand.hbm [shape: f32[2,8,32], index: 1, kind: input, shape index: {}]
  %s2 = inlined_call_operand.vmem [shape: f32[2,8], index: 2, kind: input, shape index: {}]
  %s3 = inlined_call_operand.hbm [shape: f32[64,128], index: 3, kind: input, shape index: {}]
  %s4 = inlined_call_operand.hbm [shape: f32[32,64], index: 4, kind: input, shape index: {}]
  %s5 = inlined_call_operand.hbm [shape: f32[32,32], index: 5, kind: input, shape index: {}]
  %s6 = inlined_call_operand.vmem [shape: f32[1,1,32], index: 6, kind: input, shape index: {}]
  %s7 = inlined_call_operand.vmem [shape: f32[1,1,32], index: 7, kind: input, shape index: {}]
  %s8 = inlined_call_operand.hbm [shape: f32[32,32], index: 8, kind: input, shape index: {}]
  %s9 = inlined_call_operand.vmem [shape: f32[1,32], index: 9, kind: input, shape index: {}]
  %s10 = inlined_call_operand.hbm [shape: f32[6,2,128], index: 10, kind: output, shape index: {}]
  %s11 = sld [smem:[#allocation0]]
  $region101: #{tpu_custom_call.1} parent=0
    _
  %s13 = ssub.s32 1, %s11
  %s14 = scalar_select 0, %s13, %s11
  $region1: #{tpu_custom_call.1} parent=0
    #allocation5 [shape = 'u8[6144]{0}', space=vmem, size = 0x1800, scoped, tag = 'input window, operand 0']
    #allocation6 [shape = 's32[2]{0}', space=sflag, size = 0x8, scoped, tag = 'scoped memory for tpu_custom_call.1']
    #allocation7 [shape = 's32[2]{0}', space=sflag, size = 0x8, scoped, tag = 'scoped memory for tpu_custom_call.1']
    #allocation8 [shape = 'u8[8192]{0}', space=vmem, size = 0x2000, scoped, tag = 'input window, operand 1, single buffered']
    #allocation9 [shape = 's32[1]{0}', space=sflag, size = 0x4, scoped, tag = 'scoped memory for tpu_custom_call.1']
    #allocation10 [shape = 'u8[32768]{0}', space=vmem, size = 0x8000, scoped, tag = 'input window, operand 3, single buffered']
    #allocation11 [shape = 'u8[16384]{0}', space=vmem, size = 0x4000, scoped, tag = 'input window, operand 4, single buffered']
    #allocation12 [shape = 's32[1]{0}', space=sflag, size = 0x4, scoped, tag = 'scoped memory for tpu_custom_call.1']
    #allocation13 [shape = 'u8[16384]{0}', space=vmem, size = 0x4000, scoped, tag = 'input window, operand 5, single buffered']
    #allocation14 [shape = 'u8[16384]{0}', space=vmem, size = 0x4000, scoped, tag = 'input window, operand 8, single buffered']
    #allocation15 [shape = 's32[1]{0}', space=sflag, size = 0x4, scoped, tag = 'scoped memory for tpu_custom_call.1']
    #allocation16 [shape = 'u8[6144]{0}', space=vmem, size = 0x1800, scoped, tag = 'output window, operand 0']
    %15 = vsyncpa [#allocation6], 0
    %s16 = scalar_lea.sflag [#allocation6], 1
    %17 = vsyncpa %s16, 0
    %18 = vsyncpa [#allocation9], 0
    %19 = vsyncpa [#allocation12], 0
    %20 = vsyncpa [#allocation15], 0
    %21 = vsyncpa [#allocation7], 0
    %s22 = scalar_lea.sflag [#allocation7], 1
    %23 = vsyncpa %s22, 0
    loop: start=0, step=1, limit=4
    $region2: #{tpu_custom_call.1} parent=1 // loop_pre_header
      _
    $region3: #{tpu_custom_call.1} parent=1 // loop_header
      %s25 = sphi 0, %s29
      %p26 = scmp.ge.s32.totalorder %s25, 4
      %s32 = sphi 0, %s44
      %s33 = sphi 0, %s40
      %s34 = sphi 0, %s32
      %s35 = sphi 0, %s33
      %s36 = sphi 0, %s34
      %s37 = sphi 0, %s35
      %s49 = sphi 0, %s51
      %s52 = sphi 0, %s49
      %s53 = sphi 0, %s52
      %s69 = sphi 0, %s53
      %s75 = sphi 0, %s77
      %s78 = sphi 0, %s75
      %s79 = sphi 0, %s78
      %s95 = sphi 0, %s79
      %s101 = sphi 0, %s103
      %s104 = sphi 0, %s101
      %s105 = sphi 0, %s104
      %s121 = sphi 0, %s105
      %s125 = sphi 0, %s125
      %s127 = sphi 0, %s125
      %s128 = sphi 0, %s127
      %s142 = sphi 0, %s128
      %s146 = sphi 0, %s146
      %s148 = sphi 0, %s146
      %s149 = sphi 0, %s148
      %s163 = sphi 0, %s149
      %s167 = sphi 0, %s167
      %s169 = sphi 0, %s167
      %s170 = sphi 0, %s169
      %s184 = sphi 0, %s170
      %s188 = sphi 0, %s188
      %s190 = sphi 0, %s188
      %s191 = sphi 0, %s190
      %s205 = sphi 0, %s191
      %s209 = sphi 0, %s209
      %s211 = sphi 0, %s209
      %s212 = sphi 0, %s211
      %s226 = sphi 0, %s212
      %s230 = sphi 0, %s230
      %s232 = sphi 0, %s230
      %s233 = sphi 0, %s232
      %s247 = sphi 0, %s233
      %s251 = sphi 0, %s251
      %s253 = sphi 0, %s251
      %s254 = sphi 0, %s253
      %s268 = sphi 0, %s254
      %s276 = sphi 0, %s278
      %s279 = sphi 0, %s276
      %s280 = sphi 0, %s279
      %s296 = sphi 0, %s280
    $region4: #{tpu_custom_call.1} parent=1 // loop_header_branch
      %28 = sbr.rel (%p26) target = $region8
    $region5: #{tpu_custom_call.1} parent=1 // loop_body
      %s30 = ssub.s32 %s25, 1
      %s31 = ssub.s32 %s25, 2
      %s38 = sadd.s32 1, %s33
      %p39 = scmp.ge.s32.totalorder %s38, 2
      %s40 = scalar_select %p39, 0, %s38
      %s41 = sadd.s32 1, %s32
      %s42 = scalar_select %p39, %s41, %s32
      %p43 = scmp.ge.s32.totalorder %s42, 1
      %s44 = scalar_select %p43, 0, %s42
      %s45 = ssub.s32 %s33, %s40
      %s46 = ssub.s32 %s32, %s44
      %s47 = sor.u32 %s45, %s46
      %p48 = scmp.eq.s32.totalorder %s47, 0
      %s50 = sadd.s32 %s49, 1
      %s51 = scalar_select %p48, %s49, %s50
      %p54 = pneg %p48
      %p55 = scmp.eq.s32.totalorder %s25, 1
      %p56 = por %p54, %p55
      %p57 = scmp.ne.s32.totalorder %s49, %s52
      %p58 = scmp.eq.s32.totalorder %s25, 0
      %p59 = por %p57, %p58
      %p60 = scmp.ne.s32.totalorder %s49, %s52
      %p61 = scmp.eq.s32.totalorder %s30, 1
      %p62 = por %p60, %p61
      %p63 = scmp.ne.s32.totalorder %s52, %s53
      %p64 = scmp.eq.s32.totalorder %s30, 0
      %p65 = por %p63, %p64
      %p66 = scmp.ne.s32.totalorder %s52, %s53
      %p67 = scmp.eq.s32.totalorder %s31, 1
      %p68 = por %p66, %p67
      %p70 = scmp.ne.s32.totalorder %s53, %s69
      %p71 = scmp.eq.s32.totalorder %s31, 0
      %p72 = por %p70, %p71
      %s73 = ssub.s32 %s32, %s44
      %p74 = scmp.eq.s32.totalorder %s73, 0
      %s76 = sadd.s32 %s75, 1
      %s77 = scalar_select %p74, %s75, %s76
      %p80 = pneg %p74
      %p81 = scmp.eq.s32.totalorder %s25, 1
      %p82 = por %p80, %p81
      %p83 = scmp.ne.s32.totalorder %s75, %s78
      %p84 = scmp.eq.s32.totalorder %s25, 0
      %p85 = por %p83, %p84
      %p86 = scmp.ne.s32.totalorder %s75, %s78
      %p87 = scmp.eq.s32.totalorder %s30, 1
      %p88 = por %p86, %p87
      %p89 = scmp.ne.s32.totalorder %s78, %s79
      %p90 = scmp.eq.s32.totalorder %s30, 0
      %p91 = por %p89, %p90
      %p92 = scmp.ne.s32.totalorder %s78, %s79
      %p93 = scmp.eq.s32.totalorder %s31, 1
      %p94 = por %p92, %p93
      %p96 = scmp.ne.s32.totalorder %s79, %s95
      %p97 = scmp.eq.s32.totalorder %s31, 0
      %p98 = por %p96, %p97
      %s99 = ssub.s32 %s32, %s44
      %p100 = scmp.eq.s32.totalorder %s99, 0
      %s102 = sadd.s32 %s101, 1
      %s103 = scalar_select %p100, %s101, %s102
      %p106 = pneg %p100
      %p107 = scmp.eq.s32.totalorder %s25, 1
      %p108 = por %p106, %p107
      %p109 = scmp.ne.s32.totalorder %s101, %s104
      %p110 = scmp.eq.s32.totalorder %s25, 0
      %p111 = por %p109, %p110
      %p112 = scmp.ne.s32.totalorder %s101, %s104
      %p113 = scmp.eq.s32.totalorder %s30, 1
      %p114 = por %p112, %p113
      %p115 = scmp.ne.s32.totalorder %s104, %s105
      %p116 = scmp.eq.s32.totalorder %s30, 0
      %p117 = por %p115, %p116
      %p118 = scmp.ne.s32.totalorder %s104, %s105
      %p119 = scmp.eq.s32.totalorder %s31, 1
      %p120 = por %p118, %p119
      %p122 = scmp.ne.s32.totalorder %s105, %s121
      %p123 = scmp.eq.s32.totalorder %s31, 0
      %p124 = por %p122, %p123
      %s126 = sadd.s32 %s125, 1
      %p129 = scmp.eq.s32.totalorder %s25, 1
      %p130 = scmp.ne.s32.totalorder %s125, %s127
      %p131 = scmp.eq.s32.totalorder %s25, 0
      %p132 = por %p130, %p131
      %p133 = scmp.ne.s32.totalorder %s125, %s127
      %p134 = scmp.eq.s32.totalorder %s30, 1
      %p135 = por %p133, %p134
      %p136 = scmp.ne.s32.totalorder %s127, %s128
      %p137 = scmp.eq.s32.totalorder %s30, 0
      %p138 = por %p136, %p137
      %p139 = scmp.ne.s32.totalorder %s127, %s128
      %p140 = scmp.eq.s32.totalorder %s31, 1
      %p141 = por %p139, %p140
      %p143 = scmp.ne.s32.totalorder %s128, %s142
      %p144 = scmp.eq.s32.totalorder %s31, 0
      %p145 = por %p143, %p144
      %s147 = sadd.s32 %s146, 1
      %p150 = scmp.eq.s32.totalorder %s25, 1
      %p151 = scmp.ne.s32.totalorder %s146, %s148
      %p152 = scmp.eq.s32.totalorder %s25, 0
      %p153 = por %p151, %p152
      %p154 = scmp.ne.s32.totalorder %s146, %s148
      %p155 = scmp.eq.s32.totalorder %s30, 1
      %p156 = por %p154, %p155
      %p157 = scmp.ne.s32.totalorder %s148, %s149
      %p158 = scmp.eq.s32.totalorder %s30, 0
      %p159 = por %p157, %p158
      %p160 = scmp.ne.s32.totalorder %s148, %s149
      %p161 = scmp.eq.s32.totalorder %s31, 1
      %p162 = por %p160, %p161
      %p164 = scmp.ne.s32.totalorder %s149, %s163
      %p165 = scmp.eq.s32.totalorder %s31, 0
      %p166 = por %p164, %p165
      %s168 = sadd.s32 %s167, 1
      %p171 = scmp.eq.s32.totalorder %s25, 1
      %p172 = scmp.ne.s32.totalorder %s167, %s169
      %p173 = scmp.eq.s32.totalorder %s25, 0
      %p174 = por %p172, %p173
      %p175 = scmp.ne.s32.totalorder %s167, %s169
      %p176 = scmp.eq.s32.totalorder %s30, 1
      %p177 = por %p175, %p176
      %p178 = scmp.ne.s32.totalorder %s169, %s170
      %p179 = scmp.eq.s32.totalorder %s30, 0
      %p180 = por %p178, %p179
      %p181 = scmp.ne.s32.totalorder %s169, %s170
      %p182 = scmp.eq.s32.totalorder %s31, 1
      %p183 = por %p181, %p182
      %p185 = scmp.ne.s32.totalorder %s170, %s184
      %p186 = scmp.eq.s32.totalorder %s31, 0
      %p187 = por %p185, %p186
      %s189 = sadd.s32 %s188, 1
      %p192 = scmp.eq.s32.totalorder %s25, 1
      %p193 = scmp.ne.s32.totalorder %s188, %s190
      %p194 = scmp.eq.s32.totalorder %s25, 0
      %p195 = por %p193, %p194
      %p196 = scmp.ne.s32.totalorder %s188, %s190
      %p197 = scmp.eq.s32.totalorder %s30, 1
      %p198 = por %p196, %p197
      %p199 = scmp.ne.s32.totalorder %s190, %s191
      %p200 = scmp.eq.s32.totalorder %s30, 0
      %p201 = por %p199, %p200
      %p202 = scmp.ne.s32.totalorder %s190, %s191
      %p203 = scmp.eq.s32.totalorder %s31, 1
      %p204 = por %p202, %p203
      %p206 = scmp.ne.s32.totalorder %s191, %s205
      %p207 = scmp.eq.s32.totalorder %s31, 0
      %p208 = por %p206, %p207
      %s210 = sadd.s32 %s209, 1
      %p213 = scmp.eq.s32.totalorder %s25, 1
      %p214 = scmp.ne.s32.totalorder %s209, %s211
      %p215 = scmp.eq.s32.totalorder %s25, 0
      %p216 = por %p214, %p215
      %p217 = scmp.ne.s32.totalorder %s209, %s211
      %p218 = scmp.eq.s32.totalorder %s30, 1
      %p219 = por %p217, %p218
      %p220 = scmp.ne.s32.totalorder %s211, %s212
      %p221 = scmp.eq.s32.totalorder %s30, 0
      %p222 = por %p220, %p221
      %p223 = scmp.ne.s32.totalorder %s211, %s212
      %p224 = scmp.eq.s32.totalorder %s31, 1
      %p225 = por %p223, %p224
      %p227 = scmp.ne.s32.totalorder %s212, %s226
      %p228 = scmp.eq.s32.totalorder %s31, 0
      %p229 = por %p227, %p228
      %s231 = sadd.s32 %s230, 1
      %p234 = scmp.eq.s32.totalorder %s25, 1
      %p235 = scmp.ne.s32.totalorder %s230, %s232
      %p236 = scmp.eq.s32.totalorder %s25, 0
      %p237 = por %p235, %p236
      %p238 = scmp.ne.s32.totalorder %s230, %s232
      %p239 = scmp.eq.s32.totalorder %s30, 1
      %p240 = por %p238, %p239
      %p241 = scmp.ne.s32.totalorder %s232, %s233
      %p242 = scmp.eq.s32.totalorder %s30, 0
      %p243 = por %p241, %p242
      %p244 = scmp.ne.s32.totalorder %s232, %s233
      %p245 = scmp.eq.s32.totalorder %s31, 1
      %p246 = por %p244, %p245
      %p248 = scmp.ne.s32.totalorder %s233, %s247
      %p249 = scmp.eq.s32.totalorder %s31, 0
      %p250 = por %p248, %p249
      %s252 = sadd.s32 %s251, 1
      %p255 = scmp.eq.s32.totalorder %s25, 1
      %p256 = scmp.ne.s32.totalorder %s251, %s253
      %p257 = scmp.eq.s32.totalorder %s25, 0
      %p258 = por %p256, %p257
      %p259 = scmp.ne.s32.totalorder %s251, %s253
      %p260 = scmp.eq.s32.totalorder %s30, 1
      %p261 = por %p259, %p260
      %p262 = scmp.ne.s32.totalorder %s253, %s254
      %p263 = scmp.eq.s32.totalorder %s30, 0
      %p264 = por %p262, %p263
      %p265 = scmp.ne.s32.totalorder %s253, %s254
      %p266 = scmp.eq.s32.totalorder %s31, 1
      %p267 = por %p265, %p266
      %p269 = scmp.ne.s32.totalorder %s254, %s268
      %p270 = scmp.eq.s32.totalorder %s31, 0
      %p271 = por %p269, %p270
      %s272 = ssub.s32 %s33, %s40
      %s273 = ssub.s32 %s32, %s44
      %s274 = sor.u32 %s272, %s273
      %p275 = scmp.eq.s32.totalorder %s274, 0
      %s277 = sadd.s32 %s276, 1
      %s278 = scalar_select %p275, %s276, %s277
      %p281 = pneg %p275
      %p282 = scmp.eq.s32.totalorder %s25, 1
      %p283 = por %p281, %p282
      %p284 = scmp.ne.s32.totalorder %s276, %s279
      %p285 = scmp.eq.s32.totalorder %s25, 0
      %p286 = por %p284, %p285
      %p287 = scmp.ne.s32.totalorder %s276, %s279
      %p288 = scmp.eq.s32.totalorder %s30, 1
      %p289 = por %p287, %p288
      %p290 = scmp.ne.s32.totalorder %s279, %s280
      %p291 = scmp.eq.s32.totalorder %s30, 0
      %p292 = por %p290, %p291
      %p293 = scmp.ne.s32.totalorder %s279, %s280
      %p294 = scmp.eq.s32.totalorder %s31, 1
      %p295 = por %p293, %p294
      %p297 = scmp.ne.s32.totalorder %s280, %s296
      %p298 = scmp.eq.s32.totalorder %s31, 0
      %p299 = por %p297, %p298
      %p300 = scmp.le.s32.totalorder 1, %s25
      %p301 = scmp.lt.s32.totalorder %s25, 3
      %p302 = pnand %p300, %p301
      %p303 = pneg %p302
      // Predicated region
      $region9: #{tpu_custom_call.1} parent=5 // pred_check
        _
      $region10: #{tpu_custom_call.1} parent=5 // pred_check_branch
        %305 = sbr.rel (%p302) target = $region12
      $region11: #{tpu_custom_call.1} parent=5 // pred_region
        %s306 = ssub.s32 %s25, 1
        // Predicated region
        $region13: #{tpu_custom_call.1} parent=11 // pred_check
          %p307 = pneg %p91
        $region14: #{tpu_custom_call.1} parent=11 // pred_check_branch
          %309 = sbr.rel (%p307) target = $region16
        $region15: #{tpu_custom_call.1} parent=11 // pred_region
          %s310 = smul.u32 2, %s34
          %s312 = ssub.s32 256, 256
          %313 = vsyncadd [#allocation9], %s312
          %s314 = smul.addr %s310, 128
          %s315 = scalar_lea.hbm %s1, %s314
          %s316 = sshll.u32 [#allocation8], 4
          %s317 = int_to_ptr.vmem [resolvable:$true] %s316
          %322 = dma.hbm_to_vmem [thread:$0]  %s315, 256, %s317, [#allocation9], 128, 128, 8
        $region16: #{tpu_custom_call.1} parent=11 // pred_fallthru
          _
        // Predicated region
        $region17: #{tpu_custom_call.1} parent=11 // pred_check
          %p323 = pneg %p117
        $region18: #{tpu_custom_call.1} parent=11 // pred_check_branch
          %325 = sbr.rel (%p323) target = $region20
        $region19: #{tpu_custom_call.1} parent=11 // pred_region
          %p326 = scmp.lt.s32.totalorder %s34, 0
          %s327 = scalar_select %p326, %s34, 0
          %s328 = smul.addr %s327, 2
          %s329 = scalar_lea.vmem %s2, %s328
        $region20: #{tpu_custom_call.1} parent=11 // pred_fallthru
          _
        // Predicated region
        $region21: #{tpu_custom_call.1} parent=11 // pred_check
          %p330 = pneg %p138
        $region22: #{tpu_custom_call.1} parent=11 // pred_check_branch
          %332 = sbr.rel (%p330) target = $region24
        $region23: #{tpu_custom_call.1} parent=11 // pred_region
          %s334 = ssub.s32 1024, 1024
          %335 = vsyncadd [#allocation9], %s334
          %s336 = sshll.u32 [#allocation10], 4
          %s337 = int_to_ptr.vmem [resolvable:$true] %s336
          %342 = dma.hbm_to_vmem [thread:$0]  %s3, 1024, %s337, [#allocation9], 128, 128, 8
        $region24: #{tpu_custom_call.1} parent=11 // pred_fallthru
          _
        // Predicated region
        $region25: #{tpu_custom_call.1} parent=11 // pred_check
          %p343 = pneg %p159
        $region26: #{tpu_custom_call.1} parent=11 // pred_check_branch
          %345 = sbr.rel (%p343) target = $region28
        $region27: #{tpu_custom_call.1} parent=11 // pred_region
          %s347 = ssub.s32 512, 512
          %348 = vsyncadd [#allocation12], %s347
          %s349 = sshll.u32 [#allocation11], 4
          %s350 = int_to_ptr.vmem [resolvable:$true] %s349
          %355 = dma.hbm_to_vmem [thread:$0]  %s4, 512, %s350, [#allocation12], 128, 128, 8
        $region28: #{tpu_custom_call.1} parent=11 // pred_fallthru
          _
        // Predicated region
        $region29: #{tpu_custom_call.1} parent=11 // pred_check
          %p356 = pneg %p180
        $region30: #{tpu_custom_call.1} parent=11 // pred_check_branch
          %358 = sbr.rel (%p356) target = $region32
        $region31: #{tpu_custom_call.1} parent=11 // pred_region
          %s360 = ssub.s32 512, 512
          %361 = vsyncadd [#allocation12], %s360
          %s362 = sshll.u32 [#allocation13], 4
          %s363 = int_to_ptr.vmem [resolvable:$true] %s362
          %368 = dma.hbm_to_vmem [thread:$0]  %s5, 512, %s363, [#allocation12], 128, 128, 8
        $region32: #{tpu_custom_call.1} parent=11 // pred_fallthru
          _
        // Predicated region
        $region33: #{tpu_custom_call.1} parent=11 // pred_check
          %p369 = pneg %p201
        $region34: #{tpu_custom_call.1} parent=11 // pred_check_branch
          %371 = sbr.rel (%p369) target = $region36
        $region35: #{tpu_custom_call.1} parent=11 // pred_region
          _
        $region36: #{tpu_custom_call.1} parent=11 // pred_fallthru
          _
        // Predicated region
        $region37: #{tpu_custom_call.1} parent=11 // pred_check
          %p372 = pneg %p222
        $region38: #{tpu_custom_call.1} parent=11 // pred_check_branch
          %374 = sbr.rel (%p372) target = $region40
        $region39: #{tpu_custom_call.1} parent=11 // pred_region
          _
        $region40: #{tpu_custom_call.1} parent=11 // pred_fallthru
          _
        // Predicated region
        $region41: #{tpu_custom_call.1} parent=11 // pred_check
          %p375 = pneg %p243
        $region42: #{tpu_custom_call.1} parent=11 // pred_check_branch
          %377 = sbr.rel (%p375) target = $region44
        $region43: #{tpu_custom_call.1} parent=11 // pred_region
          %s379 = ssub.s32 512, 512
          %380 = vsyncadd [#allocation15], %s379
          %s381 = sshll.u32 [#allocation14], 4
          %s382 = int_to_ptr.vmem [resolvable:$true] %s381
          %387 = dma.hbm_to_vmem [thread:$0]  %s8, 512, %s382, [#allocation15], 128, 128, 8
        $region44: #{tpu_custom_call.1} parent=11 // pred_fallthru
          _
        // Predicated region
        $region45: #{tpu_custom_call.1} parent=11 // pred_check
          %p388 = pneg %p264
        $region46: #{tpu_custom_call.1} parent=11 // pred_check_branch
          %390 = sbr.rel (%p388) target = $region48
        $region47: #{tpu_custom_call.1} parent=11 // pred_region
          _
        $region48: #{tpu_custom_call.1} parent=11 // pred_fallthru
          _
      $region12: #{tpu_custom_call.1} parent=5 // pred_fallthru
        _
      %p391 = scmp.lt.s32.totalorder %s25, 2
      // Predicated region
      $region49: #{tpu_custom_call.1} parent=5 // pred_check
        %p392 = pneg %p391
      $region50: #{tpu_custom_call.1} parent=5 // pred_check_branch
        %394 = sbr.rel (%p392) target = $region52
      $region51: #{tpu_custom_call.1} parent=5 // pred_region
        // Predicated region
        $region53: #{tpu_custom_call.1} parent=51 // pred_check
          %p395 = pneg %p59
        $region54: #{tpu_custom_call.1} parent=51 // pred_check_branch
          %397 = sbr.rel (%p395) target = $region56
        $region55: #{tpu_custom_call.1} parent=51 // pred_region
          %s398 = sand.u32 %s49, 1
          %s399 = scalar_lea.sflag [#allocation6], %s398
          %s400 = sand.u32 %s49, 1
          %s401 = smul.addr %s400, 6
          %s402 = scalar_lea.vmem [#allocation5], %s401
          %s403 = smul.u32 3, %s33
          %s405 = ssub.s32 96, 96
          %406 = vsyncadd %s399, %s405
          %s407 = sadd.s32 %s32, %s403
          %s408 = smul.addr %s407, 32
          %s409 = scalar_lea.hbm %s0, %s408
          %s410 = sshll.u32 %s402, 4
          %s411 = int_to_ptr.vmem [resolvable:$true] %s410
          %416 = dma.hbm_to_vmem [thread:$0]  %s409, 96, %s411, %s399, 32, 32, 2
        $region56: #{tpu_custom_call.1} parent=51 // pred_fallthru
          _
      $region52: #{tpu_custom_call.1} parent=5 // pred_fallthru
        _
      %p417 = scmp.le.s32.totalorder 1, %s25
      %p418 = scmp.lt.s32.totalorder %s25, 3
      %p419 = pnand %p417, %p418
      %p420 = pneg %p419
      // Predicated region
      $region57: #{tpu_custom_call.1} parent=5 // pred_check
        _
      $region58: #{tpu_custom_call.1} parent=5 // pred_check_branch
        %422 = sbr.rel (%p419) target = $region60
      $region59: #{tpu_custom_call.1} parent=5 // pred_region
        %s423 = ssub.s32 %s25, 1
        %s424 = sand.u32 %s52, 1
        %s425 = scalar_lea.sflag [#allocation6], %s424
        %s426 = sand.u32 %s52, 1
        %s427 = smul.addr %s426, 6
        %s428 = scalar_lea.vmem [#allocation5], %s427
        // Predicated region
        $region61: #{tpu_custom_call.1} parent=59 // pred_check
          %p429 = pneg %p65
        $region62: #{tpu_custom_call.1} parent=59 // pred_check_branch
          %431 = sbr.rel (%p429) target = $region64
        $region63: #{tpu_custom_call.1} parent=59 // pred_region
          %432 = dma.done %s425, 96
        $region64: #{tpu_custom_call.1} parent=59 // pred_fallthru
          _
        // Predicated region
        $region65: #{tpu_custom_call.1} parent=59 // pred_check
          %p433 = pneg %p91
        $region66: #{tpu_custom_call.1} parent=59 // pred_check_branch
          %435 = sbr.rel (%p433) target = $region68
        $region67: #{tpu_custom_call.1} parent=59 // pred_region
          %436 = dma.done [#allocation9], 256
        $region68: #{tpu_custom_call.1} parent=59 // pred_fallthru
          _
        // Predicated region
        $region69: #{tpu_custom_call.1} parent=59 // pred_check
          %p437 = pneg %p138
        $region70: #{tpu_custom_call.1} parent=59 // pred_check_branch
          %439 = sbr.rel (%p437) target = $region72
        $region71: #{tpu_custom_call.1} parent=59 // pred_region
          %440 = dma.done [#allocation9], 1024
        $region72: #{tpu_custom_call.1} parent=59 // pred_fallthru
          _
        // Predicated region
        $region73: #{tpu_custom_call.1} parent=59 // pred_check
          %p441 = pneg %p159
        $region74: #{tpu_custom_call.1} parent=59 // pred_check_branch
          %443 = sbr.rel (%p441) target = $region76
        $region75: #{tpu_custom_call.1} parent=59 // pred_region
          %444 = dma.done [#allocation12], 512
        $region76: #{tpu_custom_call.1} parent=59 // pred_fallthru
          _
        // Predicated region
        $region77: #{tpu_custom_call.1} parent=59 // pred_check
          %p445 = pneg %p180
        $region78: #{tpu_custom_call.1} parent=59 // pred_check_branch
          %447 = sbr.rel (%p445) target = $region80
        $region79: #{tpu_custom_call.1} parent=59 // pred_region
          %448 = dma.done [#allocation12], 512
        $region80: #{tpu_custom_call.1} parent=59 // pred_fallthru
          _
        // Predicated region
        $region81: #{tpu_custom_call.1} parent=59 // pred_check
          %p449 = pneg %p243
        $region82: #{tpu_custom_call.1} parent=59 // pred_check_branch
          %451 = sbr.rel (%p449) target = $region84
        $region83: #{tpu_custom_call.1} parent=59 // pred_region
          %452 = dma.done [#allocation15], 512
        $region84: #{tpu_custom_call.1} parent=59 // pred_fallthru
          _
        %s453 = sand.u32 %s52, 1
        %s454 = scalar_lea.sflag [#allocation6], %s453
        %s455 = sand.u32 %s52, 1
        %s456 = smul.addr %s455, 6
        %s457 = scalar_lea.vmem [#allocation5], %s456
        %p458 = pneg %p65
        %p459 = pneg %p62
        %p460 = pneg %p91
        %p461 = pneg %p88
        %p462 = scmp.lt.s32.totalorder %s34, 0
        %s463 = scalar_select %p462, %s34, 0
        %s464 = smul.addr %s463, 2
        %s465 = scalar_lea.vmem %s2, %s464
        %p466 = pneg %p117
        %p467 = pneg %p114
        %p468 = pneg %p138
        %p469 = pneg %p135
        %p470 = pneg %p159
        %p471 = pneg %p156
        %p472 = pneg %p180
        %p473 = pneg %p177
        %p474 = pneg %p201
        %p475 = pneg %p198
        %p476 = pneg %p222
        %p477 = pneg %p219
        %p478 = pneg %p243
        %p479 = pneg %p240
        %p480 = pneg %p264
        %p481 = pneg %p261
        %p482 = pneg %p292
        %p483 = pneg %p289
        %s484 = sand.u32 %s279, 1
        %s485 = scalar_lea.sflag [#allocation7], %s484
        %s486 = sand.u32 %s279, 1
        %s487 = smul.addr %s486, 6
        %s488 = scalar_lea.vmem [#allocation16], %s487
        %s489 = smul.u32 3, %s35
        %s490 = smul.u32 2, %s34
        %p491 = scmp.lt.s32.totalorder %s34, 0
        %s492 = scalar_select %p491, %s34, 0
        %s493 = smul.addr %s492, 2
        %s494 = scalar_lea.vmem %s2, %s493
        %s495 = smul.u32 3, %s35
        %p496 = scmp.eq.s32.totalorder %s35, 0
        // Predicated region
        $region85: #{tpu_custom_call.1} parent=59 // pred_check
          %p497 = pneg %p496
        $region86: #{tpu_custom_call.1} parent=59 // pred_check_branch
          %499 = sbr.rel (%p497) target = $region88
        $region87: #{tpu_custom_call.1} parent=59 // pred_region
          %vm500 = vcmask 517120
          %501 = vst.msk [vmem:[#allocation3] sm:$0x3] %vm500, 0.0
          %vm502 = vcmask 254976
          %503 = vst.msk [vmem:[#allocation4] sm:$0x3] %vm502, 0.0
          %v504 = vld [vmem:[#allocation8] sm:$0xff]
          %v505 = vld [vmem:[#allocation8 + $0x8] sm:$0xff]
          %v506 = vld [vmem:[#allocation13] sm:$0xff]
          %v507 = vld [vmem:[#allocation13 + $0x8] sm:$0xff]
          %v508 = vld [vmem:[#allocation13 + $0x10] sm:$0xff]
          %v509 = vld [vmem:[#allocation13 + $0x18] sm:$0xff]
          %vm510 = vcmask 261120
          %v512 = vsel %vm510, %v504, 0
          %v515 = vsel %vm510, %v505, 0
          %517 = vmatprep.subr.mxu0 0.0
          %518 = vmatpush1.msra.mxu0 0.0
          %519 = vmatprep.subr.mxu0 0.0
          %520 = vmatpush1.msra.mxu0 0.0
          %521 = vmatprep.subr.mxu0 0.0
          %522 = vmatpush1.msra.mxu0 0.0
          %523 = vmatprep.subr.mxu0 0.0
          %524 = vmatpush1.msra.mxu0 0.0
          %525 = vmatprep.subr.mxu0 0.0
          %526 = vmatpush1.msra.mxu0 0.0
          %527 = vmatprep.subr.mxu0 0.0
          %528 = vmatpush1.msra.mxu0 0.0
          %529 = vmatprep.subr.mxu0 0.0
          %530 = vmatpush1.msra.mxu0 0.0
          %531 = vmatprep.subr.mxu0 0.0
          %532 = vmatpush1.msra.mxu0 0.0
          %533 = vmatprep.subr.mxu0 0.0
          %534 = vmatpush1.msra.mxu0 0.0
          %535 = vmatprep.subr.mxu0 0.0
          %536 = vmatpush1.msra.mxu0 0.0
          %537 = vmatprep.subr.mxu0 0.0
          %538 = vmatpush1.msra.mxu0 0.0
          %539 = vmatprep.subr.mxu0 0.0
          %540 = vmatpush1.msra.mxu0 0.0
          %541 = vmatprep.subr.mxu0 0.0
          %542 = vmatpush1.msra.mxu0 %v509
          %543 = vmatprep.subr.mxu0 0.0
          %544 = vmatpush1.msra.mxu0 %v508
          %545 = vmatprep.subr.mxu0 0.0
          %546 = vmatpush1.msra.mxu0 %v507
          %547 = vmatprep.subr.mxu0 0.0
          %548 = vmatpush1.msra.mxu0 %v506
          %549 = vmatprep.subr.mxu0 0.0
          %550 = vmatpush2.msra.mxu0 0.0
          %551 = vmatprep.subr.mxu0 0.0
          %552 = vmatpush2.msra.mxu0 0.0
          %553 = vmatprep.subr.mxu0 0.0
          %554 = vmatpush2.msra.mxu0 0.0
          %555 = vmatprep.subr.mxu0 0.0
          %556 = vmatpush2.msra.mxu0 0.0
          %557 = vmatprep.subr.mxu0 0.0
          %558 = vmatpush2.msra.mxu0 0.0
          %559 = vmatprep.subr.mxu0 0.0
          %560 = vmatpush2.msra.mxu0 0.0
          %561 = vmatprep.subr.mxu0 0.0
          %562 = vmatpush2.msra.mxu0 0.0
          %563 = vmatprep.subr.mxu0 0.0
          %564 = vmatpush2.msra.mxu0 0.0
          %565 = vmatprep.subr.mxu0 0.0
          %566 = vmatpush2.msra.mxu0 0.0
          %567 = vmatprep.subr.mxu0 0.0
          %568 = vmatpush2.msra.mxu0 0.0
          %569 = vmatprep.subr.mxu0 0.0
          %570 = vmatpush2.msra.mxu0 0.0
          %571 = vmatprep.subr.mxu0 0.0
          %572 = vmatpush2.msra.mxu0 0.0
          %573 = vmatprep.subr.mxu0 0.0
          %574 = vmatpush2.msra.mxu0 0.0
          %575 = vmatprep.subr.mxu0 0.0
          %576 = vmatpush2.msra.mxu0 0.0
          %577 = vmatprep.subr.mxu0 0.0
          %578 = vmatpush2.msra.mxu0 0.0
          %579 = vmatprep.subr.mxu0 0.0
          %580 = vmatpush2.msra.mxu0 0.0
          %581 = vmatprep.mubr.f32.mxu0 0.0
          %582 = vmatmul.mubr.f32.gmra.mxu0 %v512
          %v583 = vpop.f32.mrf.mxu0
          %v584 = vadd.f32 0.0, %v583
          %v585 = vpop.f32.mrf.mxu0
          %586 = vmatprep.mubr.f32.mxu0 0.0
          %587 = vmatmul.mubr.f32.gmra.mxu0 %v515
          %v588 = vpop.f32.mrf.mxu0
          %v589 = vadd.f32 0.0, %v588
          %v590 = vpop.f32.mrf.mxu0
          %591 = vdwg.mxu0
          %v592 = vld [vmem:[%s6] sm:$0x1]
          %v594 = vlaneseq
          %v595 = vshrl.u32 %v594, 7
          %v596 = vsub.s32 0, %v595
          %v597 = vrot.slane %v592, %v596
          %v599 = vadd.f32 %v584, %v597
          %v600 = vadd.f32 %v589, %v597
          %601 = vst.msk [vmem:[#allocation2] sm:$0xff] %vm510, %v599
          %602 = vst.msk [vmem:[#allocation2 + $0x8] sm:$0xff] %vm510, %v600
        $region88: #{tpu_custom_call.1} parent=59 // pred_fallthru
          _
        %v603 = vld [vmem:[%s494] sm:$0x3]
        %v604 = vld [vmem:[%s7] sm:$0x1]
        %v605 = vld [vmem:[%s9] sm:$0x1]
        %v606 = vld [vmem:[#allocation3] sm:$0x3]
        %v607 = vld [vmem:[#allocation4] sm:$0x3]
        %v608 = vld [vmem:[%s428] sm:$0x3]
        %v609 = vld [vmem:[#allocation10] sm:$0xff]
        %v610 = vld [vmem:[#allocation10 + $0x8] sm:$0xff]
        %v611 = vld [vmem:[#allocation10 + $0x10] sm:$0xff]
        %v612 = vld [vmem:[#allocation10 + $0x18] sm:$0xff]
        %v613 = vld [vmem:[#allocation10 + $0x20] sm:$0xff]
        %v614 = vld [vmem:[#allocation10 + $0x28] sm:$0xff]
        %v615 = vld [vmem:[#allocation10 + $0x30] sm:$0xff]
        %v616 = vld [vmem:[#allocation10 + $0x38] sm:$0xff]
        %vm617 = vcmask 523264
        %v619 = vsel %vm617, %v606, 0
        %621 = vmatprep.subr.mxu0 0.0
        %622 = vmatpush1.msra.mxu0 0.0
        %623 = vmatprep.subr.mxu0 0.0
        %624 = vmatpush1.msra.mxu0 0.0
        %625 = vmatprep.subr.mxu0 0.0
        %626 = vmatpush1.msra.mxu0 0.0
        %627 = vmatprep.subr.mxu0 0.0
        %628 = vmatpush1.msra.mxu0 0.0
        %629 = vmatprep.subr.mxu0 0.0
        %630 = vmatpush1.msra.mxu0 0.0
        %631 = vmatprep.subr.mxu0 0.0
        %632 = vmatpush1.msra.mxu0 0.0
        %633 = vmatprep.subr.mxu0 0.0
        %634 = vmatpush1.msra.mxu0 0.0
        %635 = vmatprep.subr.mxu0 0.0
        %636 = vmatpush1.msra.mxu0 0.0
        %637 = vmatprep.subr.mxu0 0.0
        %638 = vmatpush1.msra.mxu0 %v616
        %639 = vmatprep.subr.mxu0 0.0
        %640 = vmatpush1.msra.mxu0 %v615
        %641 = vmatprep.subr.mxu0 0.0
        %642 = vmatpush1.msra.mxu0 %v614
        %643 = vmatprep.subr.mxu0 0.0
        %644 = vmatpush1.msra.mxu0 %v613
        %645 = vmatprep.subr.mxu0 0.0
        %646 = vmatpush1.msra.mxu0 %v612
        %647 = vmatprep.subr.mxu0 0.0
        %648 = vmatpush1.msra.mxu0 %v611
        %649 = vmatprep.subr.mxu0 0.0
        %650 = vmatpush1.msra.mxu0 %v610
        %651 = vmatprep.subr.mxu0 0.0
        %652 = vmatpush1.msra.mxu0 %v609
        %653 = vmatprep.subr.mxu0 0.0
        %654 = vmatpush2.msra.mxu0 0.0
        %655 = vmatprep.subr.mxu0 0.0
        %656 = vmatpush2.msra.mxu0 0.0
        %657 = vmatprep.subr.mxu0 0.0
        %658 = vmatpush2.msra.mxu0 0.0
        %659 = vmatprep.subr.mxu0 0.0
        %660 = vmatpush2.msra.mxu0 0.0
        %661 = vmatprep.subr.mxu0 0.0
        %662 = vmatpush2.msra.mxu0 0.0
        %663 = vmatprep.subr.mxu0 0.0
        %664 = vmatpush2.msra.mxu0 0.0
        %665 = vmatprep.subr.mxu0 0.0
        %666 = vmatpush2.msra.mxu0 0.0
        %667 = vmatprep.subr.mxu0 0.0
        %668 = vmatpush2.msra.mxu0 0.0
        %669 = vmatprep.subr.mxu0 0.0
        %670 = vmatpush2.msra.mxu0 0.0
        %671 = vmatprep.subr.mxu0 0.0
        %672 = vmatpush2.msra.mxu0 0.0
        %673 = vmatprep.subr.mxu0 0.0
        %674 = vmatpush2.msra.mxu0 0.0
        %675 = vmatprep.subr.mxu0 0.0
        %676 = vmatpush2.msra.mxu0 0.0
        %677 = vmatprep.subr.mxu0 0.0
        %678 = vmatpush2.msra.mxu0 0.0
        %679 = vmatprep.subr.mxu0 0.0
        %680 = vmatpush2.msra.mxu0 0.0
        %681 = vmatprep.subr.mxu0 0.0
        %682 = vmatpush2.msra.mxu0 0.0
        %683 = vmatprep.subr.mxu0 0.0
        %684 = vmatpush2.msra.mxu0 0.0
        %685 = vmatprep.mubr.f32.mxu0 0.0
        %686 = vmatmul.mubr.f32.gmra.mxu0 %v619
        %v687 = vpop.f32.mrf.mxu0
        %v688 = vadd.f32 0.0, %v687
        %v689 = vpop.f32.mrf.mxu0
        %690 = vdwg.mxu0
        %v691 = vadd.f32 %v608, %v688
        %v692 = vxor.u32 %v691, 2147483648
        %v693 = vmul.f32 %v692, 1.442695
        %v694 = vpow.pop %v693
        %v695 = vadd.f32 %v694, 1.0
        %v696 = vrcp.pop %v695
        %v697 = vmul.f32 1.0, %v696
        %v698 = vtanh.pop %v691
        %700 = vrot.lane.b32.xlu0 %v607, 32
        %v701 = vpop.permute.xlu0 %700
        %v703 = vmul.f32 %v697, %v701
        %705 = vrot.lane.b32.xlu0 %v698, 64
        %v706 = vpop.permute.xlu0 %705
        %v708 = vmul.f32 %v697, %v706
        %710 = vrot.lane.b32.xlu0 %v708, 32
        %v711 = vpop.permute.xlu0 %710
        %v713 = vadd.f32 %v703, %v711
        %v714 = vtanh.pop %v713
        %716 = vrot.lane.b32.xlu0 %v714, 64
        %v717 = vpop.permute.xlu0 %716
        %v719 = vmul.f32 %v697, %v717
        %v720 = vld [vmem:[#allocation11] sm:$0xff]
        %v721 = vld [vmem:[#allocation11 + $0x8] sm:$0xff]
        %v722 = vld [vmem:[#allocation11 + $0x10] sm:$0xff]
        %v723 = vld [vmem:[#allocation11 + $0x18] sm:$0xff]
        %725 = vrot.lane.b32.xlu0 %v719, 32
        %v726 = vpop.permute.xlu0 %725
        %vm727 = vcmask 261120
        %v728 = vsel %vm727, %v726, 0
        %730 = vmatprep.subr.mxu0 0.0
        %731 = vmatpush1.msra.mxu0 0.0
        %732 = vmatprep.subr.mxu0 0.0
        %733 = vmatpush1.msra.mxu0 0.0
        %734 = vmatprep.subr.mxu0 0.0
        %735 = vmatpush1.msra.mxu0 0.0
        %736 = vmatprep.subr.mxu0 0.0
        %737 = vmatpush1.msra.mxu0 0.0
        %738 = vmatprep.subr.mxu0 0.0
        %739 = vmatpush1.msra.mxu0 0.0
        %740 = vmatprep.subr.mxu0 0.0
        %741 = vmatpush1.msra.mxu0 0.0
        %742 = vmatprep.subr.mxu0 0.0
        %743 = vmatpush1.msra.mxu0 0.0
        %744 = vmatprep.subr.mxu0 0.0
        %745 = vmatpush1.msra.mxu0 0.0
        %746 = vmatprep.subr.mxu0 0.0
        %747 = vmatpush1.msra.mxu0 0.0
        %748 = vmatprep.subr.mxu0 0.0
        %749 = vmatpush1.msra.mxu0 0.0
        %750 = vmatprep.subr.mxu0 0.0
        %751 = vmatpush1.msra.mxu0 0.0
        %752 = vmatprep.subr.mxu0 0.0
        %753 = vmatpush1.msra.mxu0 0.0
        %754 = vmatprep.subr.mxu0 0.0
        %755 = vmatpush1.msra.mxu0 %v723
        %756 = vmatprep.subr.mxu0 0.0
        %757 = vmatpush1.msra.mxu0 %v722
        %758 = vmatprep.subr.mxu0 0.0
        %759 = vmatpush1.msra.mxu0 %v721
        %760 = vmatprep.subr.mxu0 0.0
        %761 = vmatpush1.msra.mxu0 %v720
        %762 = vmatprep.subr.mxu0 0.0
        %763 = vmatpush2.msra.mxu0 0.0
        %764 = vmatprep.subr.mxu0 0.0
        %765 = vmatpush2.msra.mxu0 0.0
        %766 = vmatprep.subr.mxu0 0.0
        %767 = vmatpush2.msra.mxu0 0.0
        %768 = vmatprep.subr.mxu0 0.0
        %769 = vmatpush2.msra.mxu0 0.0
        %770 = vmatprep.subr.mxu0 0.0
        %771 = vmatpush2.msra.mxu0 0.0
        %772 = vmatprep.subr.mxu0 0.0
        %773 = vmatpush2.msra.mxu0 0.0
        %774 = vmatprep.subr.mxu0 0.0
        %775 = vmatpush2.msra.mxu0 0.0
        %776 = vmatprep.subr.mxu0 0.0
        %777 = vmatpush2.msra.mxu0 0.0
        %778 = vmatprep.subr.mxu0 0.0
        %779 = vmatpush2.msra.mxu0 0.0
        %780 = vmatprep.subr.mxu0 0.0
        %781 = vmatpush2.msra.mxu0 0.0
        %782 = vmatprep.subr.mxu0 0.0
        %783 = vmatpush2.msra.mxu0 0.0
        %784 = vmatprep.subr.mxu0 0.0
        %785 = vmatpush2.msra.mxu0 0.0
        %786 = vmatprep.subr.mxu0 0.0
        %787 = vmatpush2.msra.mxu0 0.0
        %788 = vmatprep.subr.mxu0 0.0
        %789 = vmatpush2.msra.mxu0 0.0
        %790 = vmatprep.subr.mxu0 0.0
        %791 = vmatpush2.msra.mxu0 0.0
        %792 = vmatprep.subr.mxu0 0.0
        %793 = vmatpush2.msra.mxu0 0.0
        %794 = vmatprep.mubr.f32.mxu0 0.0
        %795 = vmatmul.mubr.f32.gmra.mxu0 %v728
        %v796 = vpop.f32.mrf.mxu0
        %v797 = vadd.f32 0.0, %v796
        %v798 = vpop.f32.mrf.mxu0
        %799 = vdwg.mxu0
        %v800 = vld [vmem:[#allocation2] sm:$0xff]
        %v801 = vld [vmem:[#allocation2 + $0x8] sm:$0xff]
        %v804 = vunpack.c.l.s4 1966171168
        %v805 = vunpack.c.0.s8 %v804
        %v806 = vlaneseq
        %v807 = vshrl.u32 %v806, 7
        %v808 = vsub.s32 %v805, %v807
        %v809 = vrot.slane %v797, %v808
        %v810 = vcombine.high %v809, %v809
        %v812 = vunpack.c.l.s4 1966171168
        %v813 = vunpack.c.0.s8 %v812
        %v814 = vlaneseq
        %v815 = vshrl.u32 %v814, 7
        %v816 = vsub.s32 %v813, %v815
        %v817 = vrot.slane %v809, %v816
        %v819 = vunpack.c.l.s4 1966171168
        %v820 = vunpack.c.0.s8 %v819
        %v821 = vlaneseq
        %v822 = vshrl.u32 %v821, 7
        %v823 = vsub.s32 %v820, %v822
        %v824 = vrot.slane %v810, %v823
        %v825 = vlaneseq
        %v826 = vshrl.u32 %v825, 7
        %v827 = vsub.s32 0, %v826
        %v828 = vrot.slane %v817, %v827
        %v829 = vlaneseq
        %v830 = vshrl.u32 %v829, 7
        %v831 = vsub.s32 0, %v830
        %v832 = vrot.slane %v824, %v831
        %v835 = vadd.f32 %v828, %v800
        %v836 = vadd.f32 %v832, %v801
        %v837 = vtanh.pop %v835
        %v838 = vtanh.pop %v836
        %v840 = vlaneseq
        %v841 = vshrl.u32 %v840, 7
        %v842 = vsub.s32 0, %v841
        %v843 = vrot.slane %v604, %v842
        %v845 = vmul.f32 %v837, %v843
        %v846 = vmul.f32 %v838, %v843
        %v847 = vsel %vm727, %v845, 0.0
        %848 = vadd.xlane.f32.xlu0 %v847
        %v849 = vpop.xlane.xlu0 %848
        %v850 = vsel %vm727, %v846, 0.0
        %851 = vadd.xlane.f32.xlu0 %v850
        %v852 = vpop.xlane.xlu0 %851
        %v854 = vlaneseq
        %v855 = vshrl.u32 %v854, 7
        %v856 = vsub.s32 0, %v855
        %v857 = vrot.slane %v603, %v856
        %859 = vbcast.lane.b32.xlu0 %v857, 256
        %v860 = vpop.permute.xlu0 %859
        %v861 = vlaneseq
        %v862 = vshrl.u32 %v861, 7
        %v863 = vsub.s32 1, %v862
        %v864 = vrot.slane %v603, %v863
        %866 = vbcast.lane.b32.xlu0 %v864, 256
        %v867 = vpop.permute.xlu0 %866
        %v870 = vadd.f32 %v849, %v860
        %v871 = vadd.f32 %v852, %v867
        %874 = vset.pattern.permute.xlu0 0
        %875 = vperm.xlu0 %874, %v870
        %v876 = vpop.permute.xlu0 %875
        %877 = vset.pattern.permute.xlu0 0
        %878 = vperm.xlu0 %877, %v871
        %v879 = vpop.permute.xlu0 %878
        %v880 = vlaneseq
        %v881 = vand.u32 %v880, 127
        %v882 = vlaneseq
        %v883 = vshrl.u32 %v882, 7
        %v884 = vsub.s32 %v881, %v883
        %v885 = vrot.slane %v876, %v884
        %v886 = vlaneseq
        %v887 = vshrl.u32 %v886, 7
        %v888 = vsub.s32 %v881, %v887
        %v889 = vrot.slane %v879, %v888
        %vm890 = vcmask 1041409
        %v891 = vsel %vm890, %v889, %v885
        %vm893 = vcmask 58368
        %v894 = vsel %vm893, %v891, -inf
        %895 = vmax.xlane.f32.xlu0 %v894
        %v896 = vpop.xlane.xlu0 %895
        %v898 = vlaneseq
        %v899 = vshrl.u32 %v898, 7
        %v900 = vsub.s32 0, %v899
        %v901 = vrot.slane %v896, %v900
        %v902 = vlaneseq
        %v903 = vshrl.u32 %v902, 7
        %v904 = vsub.s32 1, %v903
        %v905 = vrot.slane %v896, %v904
        %v908 = vsub.f32 %v870, %v901
        %v909 = vsub.f32 %v871, %v905
        %v910 = vmul.f32 %v908, 1.442695
        %v911 = vpow.pop %v910
        %v912 = vmul.f32 %v909, 1.442695
        %v913 = vpow.pop %v912
        %916 = vset.pattern.permute.xlu0 0
        %917 = vperm.xlu0 %916, %v911
        %v918 = vpop.permute.xlu0 %917
        %919 = vset.pattern.permute.xlu0 0
        %920 = vperm.xlu0 %919, %v913
        %v921 = vpop.permute.xlu0 %920
        %v922 = vlaneseq
        %v923 = vshrl.u32 %v922, 7
        %v924 = vsub.s32 %v881, %v923
        %v925 = vrot.slane %v918, %v924
        %v926 = vlaneseq
        %v927 = vshrl.u32 %v926, 7
        %v928 = vsub.s32 %v881, %v927
        %v929 = vrot.slane %v921, %v928
        %v930 = vsel %vm890, %v929, %v925
        %v932 = vsel %vm893, %v930, 0.0
        %933 = vadd.xlane.f32.xlu0 %v932
        %v934 = vpop.xlane.xlu0 %933
        %v935 = vrcp.pop %v934
        %v937 = vlaneseq
        %v938 = vshrl.u32 %v937, 7
        %v939 = vsub.s32 0, %v938
        %v940 = vrot.slane %v935, %v939
        %v941 = vlaneseq
        %v942 = vshrl.u32 %v941, 7
        %v943 = vsub.s32 1, %v942
        %v944 = vrot.slane %v935, %v943
        %v947 = vmul.f32 %v911, %v940
        %v948 = vmul.f32 %v913, %v944
        %v949 = vld [vmem:[#allocation8] sm:$0xff]
        %v950 = vld [vmem:[#allocation8 + $0x8] sm:$0xff]
        %952 = vset.pattern.permute.xlu0 0
        %953 = vperm.xlu0 %952, %v947
        %v954 = vpop.permute.xlu0 %953
        %957 = vset.pattern.permute.xlu0 0
        %958 = vperm.xlu0 %957, %v948
        %v959 = vpop.permute.xlu0 %958
        %v961 = vmul.f32 %v954, %v949
        %v962 = vmul.f32 %v959, %v950
        %v963 = vsel %vm727, %v961, 0.0
        %v964 = vrot.slane %v963, 4
        %v965 = vadd.f32 %v963, %v964
        %v966 = vrot.slane %v965, 2
        %v967 = vadd.f32 %v965, %v966
        %v968 = vrot.slane %v967, 1
        %v969 = vadd.f32 %v967, %v968
        %v970 = vsel %vm727, %v962, 0.0
        %v971 = vrot.slane %v970, 4
        %v972 = vadd.f32 %v970, %v971
        %v973 = vrot.slane %v972, 2
        %v974 = vadd.f32 %v972, %v973
        %v975 = vrot.slane %v974, 1
        %v976 = vadd.f32 %v974, %v975
        %v977 = vld [vmem:[#allocation14] sm:$0xff]
        %v978 = vld [vmem:[#allocation14 + $0x8] sm:$0xff]
        %v979 = vld [vmem:[#allocation14 + $0x10] sm:$0xff]
        %v980 = vld [vmem:[#allocation14 + $0x18] sm:$0xff]
        %v983 = vsel %vm890, %v976, %v969
        %v984 = vsel %vm727, %v983, 0
        %986 = vmatprep.subr.mxu0 0.0
        %987 = vmatpush1.msra.mxu0 0.0
        %988 = vmatprep.subr.mxu0 0.0
        %989 = vmatpush1.msra.mxu0 0.0
        %990 = vmatprep.subr.mxu0 0.0
        %991 = vmatpush1.msra.mxu0 0.0
        %992 = vmatprep.subr.mxu0 0.0
        %993 = vmatpush1.msra.mxu0 0.0
        %994 = vmatprep.subr.mxu0 0.0
        %995 = vmatpush1.msra.mxu0 0.0
        %996 = vmatprep.subr.mxu0 0.0
        %997 = vmatpush1.msra.mxu0 0.0
        %998 = vmatprep.subr.mxu0 0.0
        %999 = vmatpush1.msra.mxu0 0.0
        %1000 = vmatprep.subr.mxu0 0.0
        %1001 = vmatpush1.msra.mxu0 0.0
        %1002 = vmatprep.subr.mxu0 0.0
        %1003 = vmatpush1.msra.mxu0 0.0
        %1004 = vmatprep.subr.mxu0 0.0
        %1005 = vmatpush1.msra.mxu0 0.0
        %1006 = vmatprep.subr.mxu0 0.0
        %1007 = vmatpush1.msra.mxu0 0.0
        %1008 = vmatprep.subr.mxu0 0.0
        %1009 = vmatpush1.msra.mxu0 0.0
        %1010 = vmatprep.subr.mxu0 0.0
        %1011 = vmatpush1.msra.mxu0 %v980
        %1012 = vmatprep.subr.mxu0 0.0
        %1013 = vmatpush1.msra.mxu0 %v979
        %1014 = vmatprep.subr.mxu0 0.0
        %1015 = vmatpush1.msra.mxu0 %v978
        %1016 = vmatprep.subr.mxu0 0.0
        %1017 = vmatpush1.msra.mxu0 %v977
        %1018 = vmatprep.subr.mxu0 0.0
        %1019 = vmatpush2.msra.mxu0 0.0
        %1020 = vmatprep.subr.mxu0 0.0
        %1021 = vmatpush2.msra.mxu0 0.0
        %1022 = vmatprep.subr.mxu0 0.0
        %1023 = vmatpush2.msra.mxu0 0.0
        %1024 = vmatprep.subr.mxu0 0.0
        %1025 = vmatpush2.msra.mxu0 0.0
        %1026 = vmatprep.subr.mxu0 0.0
        %1027 = vmatpush2.msra.mxu0 0.0
        %1028 = vmatprep.subr.mxu0 0.0
        %1029 = vmatpush2.msra.mxu0 0.0
        %1030 = vmatprep.subr.mxu0 0.0
        %1031 = vmatpush2.msra.mxu0 0.0
        %1032 = vmatprep.subr.mxu0 0.0
        %1033 = vmatpush2.msra.mxu0 0.0
        %1034 = vmatprep.subr.mxu0 0.0
        %1035 = vmatpush2.msra.mxu0 0.0
        %1036 = vmatprep.subr.mxu0 0.0
        %1037 = vmatpush2.msra.mxu0 0.0
        %1038 = vmatprep.subr.mxu0 0.0
        %1039 = vmatpush2.msra.mxu0 0.0
        %1040 = vmatprep.subr.mxu0 0.0
        %1041 = vmatpush2.msra.mxu0 0.0
        %1042 = vmatprep.subr.mxu0 0.0
        %1043 = vmatpush2.msra.mxu0 0.0
        %1044 = vmatprep.subr.mxu0 0.0
        %1045 = vmatpush2.msra.mxu0 0.0
        %1046 = vmatprep.subr.mxu0 0.0
        %1047 = vmatpush2.msra.mxu0 0.0
        %1048 = vmatprep.subr.mxu0 0.0
        %1049 = vmatpush2.msra.mxu0 0.0
        %1050 = vmatprep.mubr.f32.mxu0 0.0
        %1051 = vmatmul.mubr.f32.gmra.mxu0 %v984
        %v1052 = vpop.f32.mrf.mxu0
        %v1053 = vadd.f32 0.0, %v1052
        %v1054 = vpop.f32.mrf.mxu0
        %1055 = vdwg.mxu0
        %1057 = vrot.lane.b32.xlu0 %v1053, 32
        %v1058 = vpop.permute.xlu0 %1057
        %v1060 = vadd.f32 %v797, %v1058
        %v1062 = vlaneseq
        %v1063 = vshrl.u32 %v1062, 7
        %v1064 = vsub.s32 0, %v1063
        %v1065 = vrot.slane %v605, %v1064
        %1066 = vrot.lane.b32.xlu0 %v1065, 32
        %v1067 = vpop.permute.xlu0 %1066
        %v1069 = vadd.f32 %v1060, %v1067
        %1071 = vrot.lane.b32.xlu0 %v983, 64
        %v1072 = vpop.permute.xlu0 %1071
        %v1074 = vadd.s32 %v881, 4294967200
        %v1075 = vlaneseq
        %v1076 = vshrl.u32 %v1075, 7
        %v1077 = vsub.s32 %v1074, %v1076
        %v1078 = vrot.slane %v954, %v1077
        %v1079 = vlaneseq
        %v1080 = vshrl.u32 %v1079, 7
        %v1081 = vsub.s32 %v1074, %v1080
        %v1082 = vrot.slane %v959, %v1081
        %v1083 = vsel %vm890, %v1082, %v1078
        %v1085 = vsel %vm727, %v726, %v1069
        %v1086 = vsel %vm617, %v1085, %v1072
        %vm1087 = vcmask 785408
        %v1088 = vsel %vm1087, %v1086, %v1083
        %vm1089 = vcmask 850944
        %v1090 = vsel %vm1089, %v1088, 0.0
        %1091 = vst [vmem:[%s488] sm:$0x3] %v1090
        %1093 = vrot.lane.b32.xlu0 %v719, 64
        %v1094 = vpop.permute.xlu0 %1093
        %v1096 = vsel %vm727, %v983, %v1094
        %s1097 = scalar_lea.vmem %s428, 2 [#allocation5]
        %v1098 = vld [vmem:[%s1097] sm:$0x3]
        %v1099 = vld [vmem:[#allocation10] sm:$0xff]
        %v1100 = vld [vmem:[#allocation10 + $0x8] sm:$0xff]
        %v1101 = vld [vmem:[#allocation10 + $0x10] sm:$0xff]
        %v1102 = vld [vmem:[#allocation10 + $0x18] sm:$0xff]
        %v1103 = vld [vmem:[#allocation10 + $0x20] sm:$0xff]
        %v1104 = vld [vmem:[#allocation10 + $0x28] sm:$0xff]
        %v1105 = vld [vmem:[#allocation10 + $0x30] sm:$0xff]
        %v1106 = vld [vmem:[#allocation10 + $0x38] sm:$0xff]
        %v1108 = vsel %vm617, %v1096, 0
        %1110 = vmatprep.subr.mxu0 0.0
        %1111 = vmatpush1.msra.mxu0 0.0
        %1112 = vmatprep.subr.mxu0 0.0
        %1113 = vmatpush1.msra.mxu0 0.0
        %1114 = vmatprep.subr.mxu0 0.0
        %1115 = vmatpush1.msra.mxu0 0.0
        %1116 = vmatprep.subr.mxu0 0.0
        %1117 = vmatpush1.msra.mxu0 0.0
        %1118 = vmatprep.subr.mxu0 0.0
        %1119 = vmatpush1.msra.mxu0 0.0
        %1120 = vmatprep.subr.mxu0 0.0
        %1121 = vmatpush1.msra.mxu0 0.0
        %1122 = vmatprep.subr.mxu0 0.0
        %1123 = vmatpush1.msra.mxu0 0.0
        %1124 = vmatprep.subr.mxu0 0.0
        %1125 = vmatpush1.msra.mxu0 0.0
        %1126 = vmatprep.subr.mxu0 0.0
        %1127 = vmatpush1.msra.mxu0 %v1106
        %1128 = vmatprep.subr.mxu0 0.0
        %1129 = vmatpush1.msra.mxu0 %v1105
        %1130 = vmatprep.subr.mxu0 0.0
        %1131 = vmatpush1.msra.mxu0 %v1104
        %1132 = vmatprep.subr.mxu0 0.0
        %1133 = vmatpush1.msra.mxu0 %v1103
        %1134 = vmatprep.subr.mxu0 0.0
        %1135 = vmatpush1.msra.mxu0 %v1102
        %1136 = vmatprep.subr.mxu0 0.0
        %1137 = vmatpush1.msra.mxu0 %v1101
        %1138 = vmatprep.subr.mxu0 0.0
        %1139 = vmatpush1.msra.mxu0 %v1100
        %1140 = vmatprep.subr.mxu0 0.0
        %1141 = vmatpush1.msra.mxu0 %v1099
        %1142 = vmatprep.subr.mxu0 0.0
        %1143 = vmatpush2.msra.mxu0 0.0
        %1144 = vmatprep.subr.mxu0 0.0
        %1145 = vmatpush2.msra.mxu0 0.0
        %1146 = vmatprep.subr.mxu0 0.0
        %1147 = vmatpush2.msra.mxu0 0.0
        %1148 = vmatprep.subr.mxu0 0.0
        %1149 = vmatpush2.msra.mxu0 0.0
        %1150 = vmatprep.subr.mxu0 0.0
        %1151 = vmatpush2.msra.mxu0 0.0
        %1152 = vmatprep.subr.mxu0 0.0
        %1153 = vmatpush2.msra.mxu0 0.0
        %1154 = vmatprep.subr.mxu0 0.0
        %1155 = vmatpush2.msra.mxu0 0.0
        %1156 = vmatprep.subr.mxu0 0.0
        %1157 = vmatpush2.msra.mxu0 0.0
        %1158 = vmatprep.subr.mxu0 0.0
        %1159 = vmatpush2.msra.mxu0 0.0
        %1160 = vmatprep.subr.mxu0 0.0
        %1161 = vmatpush2.msra.mxu0 0.0
        %1162 = vmatprep.subr.mxu0 0.0
        %1163 = vmatpush2.msra.mxu0 0.0
        %1164 = vmatprep.subr.mxu0 0.0
        %1165 = vmatpush2.msra.mxu0 0.0
        %1166 = vmatprep.subr.mxu0 0.0
        %1167 = vmatpush2.msra.mxu0 0.0
        %1168 = vmatprep.subr.mxu0 0.0
        %1169 = vmatpush2.msra.mxu0 0.0
        %1170 = vmatprep.subr.mxu0 0.0
        %1171 = vmatpush2.msra.mxu0 0.0
        %1172 = vmatprep.subr.mxu0 0.0
        %1173 = vmatpush2.msra.mxu0 0.0
        %1174 = vmatprep.mubr.f32.mxu0 0.0
        %1175 = vmatmul.mubr.f32.gmra.mxu0 %v1108
        %v1176 = vpop.f32.mrf.mxu0
        %v1177 = vadd.f32 0.0, %v1176
        %v1178 = vpop.f32.mrf.mxu0
        %1179 = vdwg.mxu0
        %v1180 = vadd.f32 %v1098, %v1177
        %v1181 = vxor.u32 %v1180, 2147483648
        %v1182 = vmul.f32 %v1181, 1.442695
        %v1183 = vpow.pop %v1182
        %v1184 = vadd.f32 %v1183, 1.0
        %v1185 = vrcp.pop %v1184
        %v1186 = vmul.f32 1.0, %v1185
        %v1187 = vtanh.pop %v1180
        %v1188 = vmul.f32 %v1186, %v713
        %1190 = vrot.lane.b32.xlu0 %v1187, 64
        %v1191 = vpop.permute.xlu0 %1190
        %v1193 = vmul.f32 %v1186, %v1191
        %1195 = vrot.lane.b32.xlu0 %v1193, 32
        %v1196 = vpop.permute.xlu0 %1195
        %v1198 = vadd.f32 %v1188, %v1196
        %v1199 = vtanh.pop %v1198
        %1201 = vrot.lane.b32.xlu0 %v1199, 64
        %v1202 = vpop.permute.xlu0 %1201
        %v1204 = vmul.f32 %v1186, %v1202
        %v1205 = vld [vmem:[#allocation11] sm:$0xff]
        %v1206 = vld [vmem:[#allocation11 + $0x8] sm:$0xff]
        %v1207 = vld [vmem:[#allocation11 + $0x10] sm:$0xff]
        %v1208 = vld [vmem:[#allocation11 + $0x18] sm:$0xff]
        %1210 = vrot.lane.b32.xlu0 %v1204, 32
        %v1211 = vpop.permute.xlu0 %1210
        %v1212 = vsel %vm727, %v1211, 0
        %1214 = vmatprep.subr.mxu0 0.0
        %1215 = vmatpush1.msra.mxu0 0.0
        %1216 = vmatprep.subr.mxu0 0.0
        %1217 = vmatpush1.msra.mxu0 0.0
        %1218 = vmatprep.subr.mxu0 0.0
        %1219 = vmatpush1.msra.mxu0 0.0
        %1220 = vmatprep.subr.mxu0 0.0
        %1221 = vmatpush1.msra.mxu0 0.0
        %1222 = vmatprep.subr.mxu0 0.0
        %1223 = vmatpush1.msra.mxu0 0.0
        %1224 = vmatprep.subr.mxu0 0.0
        %1225 = vmatpush1.msra.mxu0 0.0
        %1226 = vmatprep.subr.mxu0 0.0
        %1227 = vmatpush1.msra.mxu0 0.0
        %1228 = vmatprep.subr.mxu0 0.0
        %1229 = vmatpush1.msra.mxu0 0.0
        %1230 = vmatprep.subr.mxu0 0.0
        %1231 = vmatpush1.msra.mxu0 0.0
        %1232 = vmatprep.subr.mxu0 0.0
        %1233 = vmatpush1.msra.mxu0 0.0
        %1234 = vmatprep.subr.mxu0 0.0
        %1235 = vmatpush1.msra.mxu0 0.0
        %1236 = vmatprep.subr.mxu0 0.0
        %1237 = vmatpush1.msra.mxu0 0.0
        %1238 = vmatprep.subr.mxu0 0.0
        %1239 = vmatpush1.msra.mxu0 %v1208
        %1240 = vmatprep.subr.mxu0 0.0
        %1241 = vmatpush1.msra.mxu0 %v1207
        %1242 = vmatprep.subr.mxu0 0.0
        %1243 = vmatpush1.msra.mxu0 %v1206
        %1244 = vmatprep.subr.mxu0 0.0
        %1245 = vmatpush1.msra.mxu0 %v1205
        %1246 = vmatprep.subr.mxu0 0.0
        %1247 = vmatpush2.msra.mxu0 0.0
        %1248 = vmatprep.subr.mxu0 0.0
        %1249 = vmatpush2.msra.mxu0 0.0
        %1250 = vmatprep.subr.mxu0 0.0
        %1251 = vmatpush2.msra.mxu0 0.0
        %1252 = vmatprep.subr.mxu0 0.0
        %1253 = vmatpush2.msra.mxu0 0.0
        %1254 = vmatprep.subr.mxu0 0.0
        %1255 = vmatpush2.msra.mxu0 0.0
        %1256 = vmatprep.subr.mxu0 0.0
        %1257 = vmatpush2.msra.mxu0 0.0
        %1258 = vmatprep.subr.mxu0 0.0
        %1259 = vmatpush2.msra.mxu0 0.0
        %1260 = vmatprep.subr.mxu0 0.0
        %1261 = vmatpush2.msra.mxu0 0.0
        %1262 = vmatprep.subr.mxu0 0.0
        %1263 = vmatpush2.msra.mxu0 0.0
        %1264 = vmatprep.subr.mxu0 0.0
        %1265 = vmatpush2.msra.mxu0 0.0
        %1266 = vmatprep.subr.mxu0 0.0
        %1267 = vmatpush2.msra.mxu0 0.0
        %1268 = vmatprep.subr.mxu0 0.0
        %1269 = vmatpush2.msra.mxu0 0.0
        %1270 = vmatprep.subr.mxu0 0.0
        %1271 = vmatpush2.msra.mxu0 0.0
        %1272 = vmatprep.subr.mxu0 0.0
        %1273 = vmatpush2.msra.mxu0 0.0
        %1274 = vmatprep.subr.mxu0 0.0
        %1275 = vmatpush2.msra.mxu0 0.0
        %1276 = vmatprep.subr.mxu0 0.0
        %1277 = vmatpush2.msra.mxu0 0.0
        %1278 = vmatprep.mubr.f32.mxu0 0.0
        %1279 = vmatmul.mubr.f32.gmra.mxu0 %v1212
        %v1280 = vpop.f32.mrf.mxu0
        %v1281 = vadd.f32 0.0, %v1280
        %v1282 = vpop.f32.mrf.mxu0
        %1283 = vdwg.mxu0
        %v1284 = vld [vmem:[#allocation2] sm:$0xff]
        %v1285 = vld [vmem:[#allocation2 + $0x8] sm:$0xff]
        %v1288 = vunpack.c.l.s4 1966171168
        %v1289 = vunpack.c.0.s8 %v1288
        %v1290 = vlaneseq
        %v1291 = vshrl.u32 %v1290, 7
        %v1292 = vsub.s32 %v1289, %v1291
        %v1293 = vrot.slane %v1281, %v1292
        %v1294 = vcombine.high %v1293, %v1293
        %v1296 = vunpack.c.l.s4 1966171168
        %v1297 = vunpack.c.0.s8 %v1296
        %v1298 = vlaneseq
        %v1299 = vshrl.u32 %v1298, 7
        %v1300 = vsub.s32 %v1297, %v1299
        %v1301 = vrot.slane %v1293, %v1300
        %v1303 = vunpack.c.l.s4 1966171168
        %v1304 = vunpack.c.0.s8 %v1303
        %v1305 = vlaneseq
        %v1306 = vshrl.u32 %v1305, 7
        %v1307 = vsub.s32 %v1304, %v1306
        %v1308 = vrot.slane %v1294, %v1307
        %v1309 = vlaneseq
        %v1310 = vshrl.u32 %v1309, 7
        %v1311 = vsub.s32 0, %v1310
        %v1312 = vrot.slane %v1301, %v1311
        %v1313 = vlaneseq
        %v1314 = vshrl.u32 %v1313, 7
        %v1315 = vsub.s32 0, %v1314
        %v1316 = vrot.slane %v1308, %v1315
        %v1319 = vadd.f32 %v1312, %v1284
        %v1320 = vadd.f32 %v1316, %v1285
        %v1321 = vtanh.pop %v1319
        %v1322 = vtanh.pop %v1320
        %v1323 = vmul.f32 %v1321, %v843
        %v1324 = vmul.f32 %v1322, %v843
        %v1325 = vsel %vm727, %v1323, 0.0
        %1326 = vadd.xlane.f32.xlu0 %v1325
        %v1327 = vpop.xlane.xlu0 %1326
        %v1328 = vsel %vm727, %v1324, 0.0
        %1329 = vadd.xlane.f32.xlu0 %v1328
        %v1330 = vpop.xlane.xlu0 %1329
        %v1331 = vadd.f32 %v1327, %v860
        %v1332 = vadd.f32 %v1330, %v867
        %1335 = vset.pattern.permute.xlu0 0
        %1336 = vperm.xlu0 %1335, %v1331
        %v1337 = vpop.permute.xlu0 %1336
        %1338 = vset.pattern.permute.xlu0 0
        %1339 = vperm.xlu0 %1338, %v1332
        %v1340 = vpop.permute.xlu0 %1339
        %v1341 = vlaneseq
        %v1342 = vshrl.u32 %v1341, 7
        %v1343 = vsub.s32 %v881, %v1342
        %v1344 = vrot.slane %v1337, %v1343
        %v1345 = vlaneseq
        %v1346 = vshrl.u32 %v1345, 7
        %v1347 = vsub.s32 %v881, %v1346
        %v1348 = vrot.slane %v1340, %v1347
        %v1349 = vsel %vm890, %v1348, %v1344
        %v1351 = vsel %vm893, %v1349, -inf
        %1352 = vmax.xlane.f32.xlu0 %v1351
        %v1353 = vpop.xlane.xlu0 %1352
        %v1355 = vlaneseq
        %v1356 = vshrl.u32 %v1355, 7
        %v1357 = vsub.s32 0, %v1356
        %v1358 = vrot.slane %v1353, %v1357
        %v1359 = vlaneseq
        %v1360 = vshrl.u32 %v1359, 7
        %v1361 = vsub.s32 1, %v1360
        %v1362 = vrot.slane %v1353, %v1361
        %v1365 = vsub.f32 %v1331, %v1358
        %v1366 = vsub.f32 %v1332, %v1362
        %v1367 = vmul.f32 %v1365, 1.442695
        %v1368 = vpow.pop %v1367
        %v1369 = vmul.f32 %v1366, 1.442695
        %v1370 = vpow.pop %v1369
        %1373 = vset.pattern.permute.xlu0 0
        %1374 = vperm.xlu0 %1373, %v1368
        %v1375 = vpop.permute.xlu0 %1374
        %1376 = vset.pattern.permute.xlu0 0
        %1377 = vperm.xlu0 %1376, %v1370
        %v1378 = vpop.permute.xlu0 %1377
        %v1379 = vlaneseq
        %v1380 = vshrl.u32 %v1379, 7
        %v1381 = vsub.s32 %v881, %v1380
        %v1382 = vrot.slane %v1375, %v1381
        %v1383 = vlaneseq
        %v1384 = vshrl.u32 %v1383, 7
        %v1385 = vsub.s32 %v881, %v1384
        %v1386 = vrot.slane %v1378, %v1385
        %v1387 = vsel %vm890, %v1386, %v1382
        %v1389 = vsel %vm893, %v1387, 0.0
        %1390 = vadd.xlane.f32.xlu0 %v1389
        %v1391 = vpop.xlane.xlu0 %1390
        %v1392 = vrcp.pop %v1391
        %v1394 = vlaneseq
        %v1395 = vshrl.u32 %v1394, 7
        %v1396 = vsub.s32 0, %v1395
        %v1397 = vrot.slane %v1392, %v1396
        %v1398 = vlaneseq
        %v1399 = vshrl.u32 %v1398, 7
        %v1400 = vsub.s32 1, %v1399
        %v1401 = vrot.slane %v1392, %v1400
        %v1404 = vmul.f32 %v1368, %v1397
        %v1405 = vmul.f32 %v1370, %v1401
        %v1406 = vld [vmem:[#allocation8] sm:$0xff]
        %v1407 = vld [vmem:[#allocation8 + $0x8] sm:$0xff]
        %1409 = vset.pattern.permute.xlu0 0
        %1410 = vperm.xlu0 %1409, %v1404
        %v1411 = vpop.permute.xlu0 %1410
        %1414 = vset.pattern.permute.xlu0 0
        %1415 = vperm.xlu0 %1414, %v1405
        %v1416 = vpop.permute.xlu0 %1415
        %v1418 = vmul.f32 %v1411, %v1406
        %v1419 = vmul.f32 %v1416, %v1407
        %v1420 = vsel %vm727, %v1418, 0.0
        %v1421 = vrot.slane %v1420, 4
        %v1422 = vadd.f32 %v1420, %v1421
        %v1423 = vrot.slane %v1422, 2
        %v1424 = vadd.f32 %v1422, %v1423
        %v1425 = vrot.slane %v1424, 1
        %v1426 = vadd.f32 %v1424, %v1425
        %v1427 = vsel %vm727, %v1419, 0.0
        %v1428 = vrot.slane %v1427, 4
        %v1429 = vadd.f32 %v1427, %v1428
        %v1430 = vrot.slane %v1429, 2
        %v1431 = vadd.f32 %v1429, %v1430
        %v1432 = vrot.slane %v1431, 1
        %v1433 = vadd.f32 %v1431, %v1432
        %v1434 = vld [vmem:[#allocation14] sm:$0xff]
        %v1435 = vld [vmem:[#allocation14 + $0x8] sm:$0xff]
        %v1436 = vld [vmem:[#allocation14 + $0x10] sm:$0xff]
        %v1437 = vld [vmem:[#allocation14 + $0x18] sm:$0xff]
        %v1440 = vsel %vm890, %v1433, %v1426
        %v1441 = vsel %vm727, %v1440, 0
        %1443 = vmatprep.subr.mxu0 0.0
        %1444 = vmatpush1.msra.mxu0 0.0
        %1445 = vmatprep.subr.mxu0 0.0
        %1446 = vmatpush1.msra.mxu0 0.0
        %1447 = vmatprep.subr.mxu0 0.0
        %1448 = vmatpush1.msra.mxu0 0.0
        %1449 = vmatprep.subr.mxu0 0.0
        %1450 = vmatpush1.msra.mxu0 0.0
        %1451 = vmatprep.subr.mxu0 0.0
        %1452 = vmatpush1.msra.mxu0 0.0
        %1453 = vmatprep.subr.mxu0 0.0
        %1454 = vmatpush1.msra.mxu0 0.0
        %1455 = vmatprep.subr.mxu0 0.0
        %1456 = vmatpush1.msra.mxu0 0.0
        %1457 = vmatprep.subr.mxu0 0.0
        %1458 = vmatpush1.msra.mxu0 0.0
        %1459 = vmatprep.subr.mxu0 0.0
        %1460 = vmatpush1.msra.mxu0 0.0
        %1461 = vmatprep.subr.mxu0 0.0
        %1462 = vmatpush1.msra.mxu0 0.0
        %1463 = vmatprep.subr.mxu0 0.0
        %1464 = vmatpush1.msra.mxu0 0.0
        %1465 = vmatprep.subr.mxu0 0.0
        %1466 = vmatpush1.msra.mxu0 0.0
        %1467 = vmatprep.subr.mxu0 0.0
        %1468 = vmatpush1.msra.mxu0 %v1437
        %1469 = vmatprep.subr.mxu0 0.0
        %1470 = vmatpush1.msra.mxu0 %v1436
        %1471 = vmatprep.subr.mxu0 0.0
        %1472 = vmatpush1.msra.mxu0 %v1435
        %1473 = vmatprep.subr.mxu0 0.0
        %1474 = vmatpush1.msra.mxu0 %v1434
        %1475 = vmatprep.subr.mxu0 0.0
        %1476 = vmatpush2.msra.mxu0 0.0
        %1477 = vmatprep.subr.mxu0 0.0
        %1478 = vmatpush2.msra.mxu0 0.0
        %1479 = vmatprep.subr.mxu0 0.0
        %1480 = vmatpush2.msra.mxu0 0.0
        %1481 = vmatprep.subr.mxu0 0.0
        %1482 = vmatpush2.msra.mxu0 0.0
        %1483 = vmatprep.subr.mxu0 0.0
        %1484 = vmatpush2.msra.mxu0 0.0
        %1485 = vmatprep.subr.mxu0 0.0
        %1486 = vmatpush2.msra.mxu0 0.0
        %1487 = vmatprep.subr.mxu0 0.0
        %1488 = vmatpush2.msra.mxu0 0.0
        %1489 = vmatprep.subr.mxu0 0.0
        %1490 = vmatpush2.msra.mxu0 0.0
        %1491 = vmatprep.subr.mxu0 0.0
        %1492 = vmatpush2.msra.mxu0 0.0
        %1493 = vmatprep.subr.mxu0 0.0
        %1494 = vmatpush2.msra.mxu0 0.0
        %1495 = vmatprep.subr.mxu0 0.0
        %1496 = vmatpush2.msra.mxu0 0.0
        %1497 = vmatprep.subr.mxu0 0.0
        %1498 = vmatpush2.msra.mxu0 0.0
        %1499 = vmatprep.subr.mxu0 0.0
        %1500 = vmatpush2.msra.mxu0 0.0
        %1501 = vmatprep.subr.mxu0 0.0
        %1502 = vmatpush2.msra.mxu0 0.0
        %1503 = vmatprep.subr.mxu0 0.0
        %1504 = vmatpush2.msra.mxu0 0.0
        %1505 = vmatprep.subr.mxu0 0.0
        %1506 = vmatpush2.msra.mxu0 0.0
        %1507 = vmatprep.mubr.f32.mxu0 0.0
        %1508 = vmatmul.mubr.f32.gmra.mxu0 %v1441
        %v1509 = vpop.f32.mrf.mxu0
        %v1510 = vadd.f32 0.0, %v1509
        %v1511 = vpop.f32.mrf.mxu0
        %1512 = vdwg.mxu0
        %1514 = vrot.lane.b32.xlu0 %v1510, 32
        %v1515 = vpop.permute.xlu0 %1514
        %v1517 = vadd.f32 %v1281, %v1515
        %v1518 = vadd.f32 %v1517, %v1067
        %1520 = vrot.lane.b32.xlu0 %v1440, 64
        %v1521 = vpop.permute.xlu0 %1520
        %v1523 = vlaneseq
        %v1524 = vshrl.u32 %v1523, 7
        %v1525 = vsub.s32 %v1074, %v1524
        %v1526 = vrot.slane %v1411, %v1525
        %v1527 = vlaneseq
        %v1528 = vshrl.u32 %v1527, 7
        %v1529 = vsub.s32 %v1074, %v1528
        %v1530 = vrot.slane %v1416, %v1529
        %v1531 = vsel %vm890, %v1530, %v1526
        %v1533 = vsel %vm727, %v1211, %v1518
        %v1534 = vsel %vm617, %v1533, %v1521
        %v1535 = vsel %vm1087, %v1534, %v1531
        %v1536 = vsel %vm1089, %v1535, 0.0
        %s1537 = scalar_lea.vmem %s488, 2 [#allocation16]
        %1538 = vst [vmem:[%s1537] sm:$0x3] %v1536
        %1540 = vrot.lane.b32.xlu0 %v1204, 64
        %v1541 = vpop.permute.xlu0 %1540
        %v1543 = vsel %vm727, %v1440, %v1541
        %s1544 = scalar_lea.vmem %s428, 4 [#allocation5]
        %v1545 = vld [vmem:[%s1544] sm:$0x3]
        %v1546 = vld [vmem:[#allocation10] sm:$0xff]
        %v1547 = vld [vmem:[#allocation10 + $0x8] sm:$0xff]
        %v1548 = vld [vmem:[#allocation10 + $0x10] sm:$0xff]
        %v1549 = vld [vmem:[#allocation10 + $0x18] sm:$0xff]
        %v1550 = vld [vmem:[#allocation10 + $0x20] sm:$0xff]
        %v1551 = vld [vmem:[#allocation10 + $0x28] sm:$0xff]
        %v1552 = vld [vmem:[#allocation10 + $0x30] sm:$0xff]
        %v1553 = vld [vmem:[#allocation10 + $0x38] sm:$0xff]
        %v1555 = vsel %vm617, %v1543, 0
        %1557 = vmatprep.subr.mxu0 0.0
        %1558 = vmatpush1.msra.mxu0 0.0
        %1559 = vmatprep.subr.mxu0 0.0
        %1560 = vmatpush1.msra.mxu0 0.0
        %1561 = vmatprep.subr.mxu0 0.0
        %1562 = vmatpush1.msra.mxu0 0.0
        %1563 = vmatprep.subr.mxu0 0.0
        %1564 = vmatpush1.msra.mxu0 0.0
        %1565 = vmatprep.subr.mxu0 0.0
        %1566 = vmatpush1.msra.mxu0 0.0
        %1567 = vmatprep.subr.mxu0 0.0
        %1568 = vmatpush1.msra.mxu0 0.0
        %1569 = vmatprep.subr.mxu0 0.0
        %1570 = vmatpush1.msra.mxu0 0.0
        %1571 = vmatprep.subr.mxu0 0.0
        %1572 = vmatpush1.msra.mxu0 0.0
        %1573 = vmatprep.subr.mxu0 0.0
        %1574 = vmatpush1.msra.mxu0 %v1553
        %1575 = vmatprep.subr.mxu0 0.0
        %1576 = vmatpush1.msra.mxu0 %v1552
        %1577 = vmatprep.subr.mxu0 0.0
        %1578 = vmatpush1.msra.mxu0 %v1551
        %1579 = vmatprep.subr.mxu0 0.0
        %1580 = vmatpush1.msra.mxu0 %v1550
        %1581 = vmatprep.subr.mxu0 0.0
        %1582 = vmatpush1.msra.mxu0 %v1549
        %1583 = vmatprep.subr.mxu0 0.0
        %1584 = vmatpush1.msra.mxu0 %v1548
        %1585 = vmatprep.subr.mxu0 0.0
        %1586 = vmatpush1.msra.mxu0 %v1547
        %1587 = vmatprep.subr.mxu0 0.0
        %1588 = vmatpush1.msra.mxu0 %v1546
        %1589 = vmatprep.subr.mxu0 0.0
        %1590 = vmatpush2.msra.mxu0 0.0
        %1591 = vmatprep.subr.mxu0 0.0
        %1592 = vmatpush2.msra.mxu0 0.0
        %1593 = vmatprep.subr.mxu0 0.0
        %1594 = vmatpush2.msra.mxu0 0.0
        %1595 = vmatprep.subr.mxu0 0.0
        %1596 = vmatpush2.msra.mxu0 0.0
        %1597 = vmatprep.subr.mxu0 0.0
        %1598 = vmatpush2.msra.mxu0 0.0
        %1599 = vmatprep.subr.mxu0 0.0
        %1600 = vmatpush2.msra.mxu0 0.0
        %1601 = vmatprep.subr.mxu0 0.0
        %1602 = vmatpush2.msra.mxu0 0.0
        %1603 = vmatprep.subr.mxu0 0.0
        %1604 = vmatpush2.msra.mxu0 0.0
        %1605 = vmatprep.subr.mxu0 0.0
        %1606 = vmatpush2.msra.mxu0 0.0
        %1607 = vmatprep.subr.mxu0 0.0
        %1608 = vmatpush2.msra.mxu0 0.0
        %1609 = vmatprep.subr.mxu0 0.0
        %1610 = vmatpush2.msra.mxu0 0.0
        %1611 = vmatprep.subr.mxu0 0.0
        %1612 = vmatpush2.msra.mxu0 0.0
        %1613 = vmatprep.subr.mxu0 0.0
        %1614 = vmatpush2.msra.mxu0 0.0
        %1615 = vmatprep.subr.mxu0 0.0
        %1616 = vmatpush2.msra.mxu0 0.0
        %1617 = vmatprep.subr.mxu0 0.0
        %1618 = vmatpush2.msra.mxu0 0.0
        %1619 = vmatprep.subr.mxu0 0.0
        %1620 = vmatpush2.msra.mxu0 0.0
        %1621 = vmatprep.mubr.f32.mxu0 0.0
        %1622 = vmatmul.mubr.f32.gmra.mxu0 %v1555
        %v1623 = vpop.f32.mrf.mxu0
        %v1624 = vadd.f32 0.0, %v1623
        %v1625 = vpop.f32.mrf.mxu0
        %1626 = vdwg.mxu0
        %v1627 = vadd.f32 %v1545, %v1624
        %v1628 = vxor.u32 %v1627, 2147483648
        %v1629 = vmul.f32 %v1628, 1.442695
        %v1630 = vpow.pop %v1629
        %v1631 = vadd.f32 %v1630, 1.0
        %v1632 = vrcp.pop %v1631
        %v1633 = vmul.f32 1.0, %v1632
        %v1634 = vtanh.pop %v1627
        %v1635 = vmul.f32 %v1633, %v1198
        %1637 = vrot.lane.b32.xlu0 %v1634, 64
        %v1638 = vpop.permute.xlu0 %1637
        %v1640 = vmul.f32 %v1633, %v1638
        %1642 = vrot.lane.b32.xlu0 %v1640, 32
        %v1643 = vpop.permute.xlu0 %1642
        %v1645 = vadd.f32 %v1635, %v1643
        %v1646 = vtanh.pop %v1645
        %1648 = vrot.lane.b32.xlu0 %v1646, 64
        %v1649 = vpop.permute.xlu0 %1648
        %v1651 = vmul.f32 %v1633, %v1649
        %v1652 = vld [vmem:[#allocation11] sm:$0xff]
        %v1653 = vld [vmem:[#allocation11 + $0x8] sm:$0xff]
        %v1654 = vld [vmem:[#allocation11 + $0x10] sm:$0xff]
        %v1655 = vld [vmem:[#allocation11 + $0x18] sm:$0xff]
        %1657 = vrot.lane.b32.xlu0 %v1651, 32
        %v1658 = vpop.permute.xlu0 %1657
        %v1659 = vsel %vm727, %v1658, 0
        %1661 = vmatprep.subr.mxu0 0.0
        %1662 = vmatpush1.msra.mxu0 0.0
        %1663 = vmatprep.subr.mxu0 0.0
        %1664 = vmatpush1.msra.mxu0 0.0
        %1665 = vmatprep.subr.mxu0 0.0
        %1666 = vmatpush1.msra.mxu0 0.0
        %1667 = vmatprep.subr.mxu0 0.0
        %1668 = vmatpush1.msra.mxu0 0.0
        %1669 = vmatprep.subr.mxu0 0.0
        %1670 = vmatpush1.msra.mxu0 0.0
        %1671 = vmatprep.subr.mxu0 0.0
        %1672 = vmatpush1.msra.mxu0 0.0
        %1673 = vmatprep.subr.mxu0 0.0
        %1674 = vmatpush1.msra.mxu0 0.0
        %1675 = vmatprep.subr.mxu0 0.0
        %1676 = vmatpush1.msra.mxu0 0.0
        %1677 = vmatprep.subr.mxu0 0.0
        %1678 = vmatpush1.msra.mxu0 0.0
        %1679 = vmatprep.subr.mxu0 0.0
        %1680 = vmatpush1.msra.mxu0 0.0
        %1681 = vmatprep.subr.mxu0 0.0
        %1682 = vmatpush1.msra.mxu0 0.0
        %1683 = vmatprep.subr.mxu0 0.0
        %1684 = vmatpush1.msra.mxu0 0.0
        %1685 = vmatprep.subr.mxu0 0.0
        %1686 = vmatpush1.msra.mxu0 %v1655
        %1687 = vmatprep.subr.mxu0 0.0
        %1688 = vmatpush1.msra.mxu0 %v1654
        %1689 = vmatprep.subr.mxu0 0.0
        %1690 = vmatpush1.msra.mxu0 %v1653
        %1691 = vmatprep.subr.mxu0 0.0
        %1692 = vmatpush1.msra.mxu0 %v1652
        %1693 = vmatprep.subr.mxu0 0.0
        %1694 = vmatpush2.msra.mxu0 0.0
        %1695 = vmatprep.subr.mxu0 0.0
        %1696 = vmatpush2.msra.mxu0 0.0
        %1697 = vmatprep.subr.mxu0 0.0
        %1698 = vmatpush2.msra.mxu0 0.0
        %1699 = vmatprep.subr.mxu0 0.0
        %1700 = vmatpush2.msra.mxu0 0.0
        %1701 = vmatprep.subr.mxu0 0.0
        %1702 = vmatpush2.msra.mxu0 0.0
        %1703 = vmatprep.subr.mxu0 0.0
        %1704 = vmatpush2.msra.mxu0 0.0
        %1705 = vmatprep.subr.mxu0 0.0
        %1706 = vmatpush2.msra.mxu0 0.0
        %1707 = vmatprep.subr.mxu0 0.0
        %1708 = vmatpush2.msra.mxu0 0.0
        %1709 = vmatprep.subr.mxu0 0.0
        %1710 = vmatpush2.msra.mxu0 0.0
        %1711 = vmatprep.subr.mxu0 0.0
        %1712 = vmatpush2.msra.mxu0 0.0
        %1713 = vmatprep.subr.mxu0 0.0
        %1714 = vmatpush2.msra.mxu0 0.0
        %1715 = vmatprep.subr.mxu0 0.0
        %1716 = vmatpush2.msra.mxu0 0.0
        %1717 = vmatprep.subr.mxu0 0.0
        %1718 = vmatpush2.msra.mxu0 0.0
        %1719 = vmatprep.subr.mxu0 0.0
        %1720 = vmatpush2.msra.mxu0 0.0
        %1721 = vmatprep.subr.mxu0 0.0
        %1722 = vmatpush2.msra.mxu0 0.0
        %1723 = vmatprep.subr.mxu0 0.0
        %1724 = vmatpush2.msra.mxu0 0.0
        %1725 = vmatprep.mubr.f32.mxu0 0.0
        %1726 = vmatmul.mubr.f32.gmra.mxu0 %v1659
        %v1727 = vpop.f32.mrf.mxu0
        %v1728 = vadd.f32 0.0, %v1727
        %v1729 = vpop.f32.mrf.mxu0
        %1730 = vdwg.mxu0
        %v1731 = vld [vmem:[#allocation2] sm:$0xff]
        %v1732 = vld [vmem:[#allocation2 + $0x8] sm:$0xff]
        %v1735 = vunpack.c.l.s4 1966171168
        %v1736 = vunpack.c.0.s8 %v1735
        %v1737 = vlaneseq
        %v1738 = vshrl.u32 %v1737, 7
        %v1739 = vsub.s32 %v1736, %v1738
        %v1740 = vrot.slane %v1728, %v1739
        %v1741 = vcombine.high %v1740, %v1740
        %v1743 = vunpack.c.l.s4 1966171168
        %v1744 = vunpack.c.0.s8 %v1743
        %v1745 = vlaneseq
        %v1746 = vshrl.u32 %v1745, 7
        %v1747 = vsub.s32 %v1744, %v1746
        %v1748 = vrot.slane %v1740, %v1747
        %v1750 = vunpack.c.l.s4 1966171168
        %v1751 = vunpack.c.0.s8 %v1750
        %v1752 = vlaneseq
        %v1753 = vshrl.u32 %v1752, 7
        %v1754 = vsub.s32 %v1751, %v1753
        %v1755 = vrot.slane %v1741, %v1754
        %v1756 = vlaneseq
        %v1757 = vshrl.u32 %v1756, 7
        %v1758 = vsub.s32 0, %v1757
        %v1759 = vrot.slane %v1748, %v1758
        %v1760 = vlaneseq
        %v1761 = vshrl.u32 %v1760, 7
        %v1762 = vsub.s32 0, %v1761
        %v1763 = vrot.slane %v1755, %v1762
        %v1766 = vadd.f32 %v1759, %v1731
        %v1767 = vadd.f32 %v1763, %v1732
        %v1768 = vtanh.pop %v1766
        %v1769 = vtanh.pop %v1767
        %v1770 = vmul.f32 %v1768, %v843
        %v1771 = vmul.f32 %v1769, %v843
        %v1772 = vsel %vm727, %v1770, 0.0
        %1773 = vadd.xlane.f32.xlu0 %v1772
        %v1774 = vpop.xlane.xlu0 %1773
        %v1775 = vsel %vm727, %v1771, 0.0
        %1776 = vadd.xlane.f32.xlu0 %v1775
        %v1777 = vpop.xlane.xlu0 %1776
        %v1778 = vadd.f32 %v1774, %v860
        %v1779 = vadd.f32 %v1777, %v867
        %1782 = vset.pattern.permute.xlu0 0
        %1783 = vperm.xlu0 %1782, %v1778
        %v1784 = vpop.permute.xlu0 %1783
        %1785 = vset.pattern.permute.xlu0 0
        %1786 = vperm.xlu0 %1785, %v1779
        %v1787 = vpop.permute.xlu0 %1786
        %v1788 = vlaneseq
        %v1789 = vshrl.u32 %v1788, 7
        %v1790 = vsub.s32 %v881, %v1789
        %v1791 = vrot.slane %v1784, %v1790
        %v1792 = vlaneseq
        %v1793 = vshrl.u32 %v1792, 7
        %v1794 = vsub.s32 %v881, %v1793
        %v1795 = vrot.slane %v1787, %v1794
        %v1796 = vsel %vm890, %v1795, %v1791
        %v1798 = vsel %vm893, %v1796, -inf
        %1799 = vmax.xlane.f32.xlu0 %v1798
        %v1800 = vpop.xlane.xlu0 %1799
        %v1802 = vlaneseq
        %v1803 = vshrl.u32 %v1802, 7
        %v1804 = vsub.s32 0, %v1803
        %v1805 = vrot.slane %v1800, %v1804
        %v1806 = vlaneseq
        %v1807 = vshrl.u32 %v1806, 7
        %v1808 = vsub.s32 1, %v1807
        %v1809 = vrot.slane %v1800, %v1808
        %v1812 = vsub.f32 %v1778, %v1805
        %v1813 = vsub.f32 %v1779, %v1809
        %v1814 = vmul.f32 %v1812, 1.442695
        %v1815 = vpow.pop %v1814
        %v1816 = vmul.f32 %v1813, 1.442695
        %v1817 = vpow.pop %v1816
        %1820 = vset.pattern.permute.xlu0 0
        %1821 = vperm.xlu0 %1820, %v1815
        %v1822 = vpop.permute.xlu0 %1821
        %1823 = vset.pattern.permute.xlu0 0
        %1824 = vperm.xlu0 %1823, %v1817
        %v1825 = vpop.permute.xlu0 %1824
        %v1826 = vlaneseq
        %v1827 = vshrl.u32 %v1826, 7
        %v1828 = vsub.s32 %v881, %v1827
        %v1829 = vrot.slane %v1822, %v1828
        %v1830 = vlaneseq
        %v1831 = vshrl.u32 %v1830, 7
        %v1832 = vsub.s32 %v881, %v1831
        %v1833 = vrot.slane %v1825, %v1832
        %v1834 = vsel %vm890, %v1833, %v1829
        %v1836 = vsel %vm893, %v1834, 0.0
        %1837 = vadd.xlane.f32.xlu0 %v1836
        %v1838 = vpop.xlane.xlu0 %1837
        %v1839 = vrcp.pop %v1838
        %v1841 = vlaneseq
        %v1842 = vshrl.u32 %v1841, 7
        %v1843 = vsub.s32 0, %v1842
        %v1844 = vrot.slane %v1839, %v1843
        %v1845 = vlaneseq
        %v1846 = vshrl.u32 %v1845, 7
        %v1847 = vsub.s32 1, %v1846
        %v1848 = vrot.slane %v1839, %v1847
        %v1851 = vmul.f32 %v1815, %v1844
        %v1852 = vmul.f32 %v1817, %v1848
        %v1853 = vld [vmem:[#allocation8] sm:$0xff]
        %v1854 = vld [vmem:[#allocation8 + $0x8] sm:$0xff]
        %1856 = vset.pattern.permute.xlu0 0
        %1857 = vperm.xlu0 %1856, %v1851
        %v1858 = vpop.permute.xlu0 %1857
        %1861 = vset.pattern.permute.xlu0 0
        %1862 = vperm.xlu0 %1861, %v1852
        %v1863 = vpop.permute.xlu0 %1862
        %v1865 = vmul.f32 %v1858, %v1853
        %v1866 = vmul.f32 %v1863, %v1854
        %v1867 = vsel %vm727, %v1865, 0.0
        %v1868 = vrot.slane %v1867, 4
        %v1869 = vadd.f32 %v1867, %v1868
        %v1870 = vrot.slane %v1869, 2
        %v1871 = vadd.f32 %v1869, %v1870
        %v1872 = vrot.slane %v1871, 1
        %v1873 = vadd.f32 %v1871, %v1872
        %v1874 = vsel %vm727, %v1866, 0.0
        %v1875 = vrot.slane %v1874, 4
        %v1876 = vadd.f32 %v1874, %v1875
        %v1877 = vrot.slane %v1876, 2
        %v1878 = vadd.f32 %v1876, %v1877
        %v1879 = vrot.slane %v1878, 1
        %v1880 = vadd.f32 %v1878, %v1879
        %v1881 = vld [vmem:[#allocation14] sm:$0xff]
        %v1882 = vld [vmem:[#allocation14 + $0x8] sm:$0xff]
        %v1883 = vld [vmem:[#allocation14 + $0x10] sm:$0xff]
        %v1884 = vld [vmem:[#allocation14 + $0x18] sm:$0xff]
        %v1887 = vsel %vm890, %v1880, %v1873
        %v1888 = vsel %vm727, %v1887, 0
        %1890 = vmatprep.subr.mxu0 0.0
        %1891 = vmatpush1.msra.mxu0 0.0
        %1892 = vmatprep.subr.mxu0 0.0
        %1893 = vmatpush1.msra.mxu0 0.0
        %1894 = vmatprep.subr.mxu0 0.0
        %1895 = vmatpush1.msra.mxu0 0.0
        %1896 = vmatprep.subr.mxu0 0.0
        %1897 = vmatpush1.msra.mxu0 0.0
        %1898 = vmatprep.subr.mxu0 0.0
        %1899 = vmatpush1.msra.mxu0 0.0
        %1900 = vmatprep.subr.mxu0 0.0
        %1901 = vmatpush1.msra.mxu0 0.0
        %1902 = vmatprep.subr.mxu0 0.0
        %1903 = vmatpush1.msra.mxu0 0.0
        %1904 = vmatprep.subr.mxu0 0.0
        %1905 = vmatpush1.msra.mxu0 0.0
        %1906 = vmatprep.subr.mxu0 0.0
        %1907 = vmatpush1.msra.mxu0 0.0
        %1908 = vmatprep.subr.mxu0 0.0
        %1909 = vmatpush1.msra.mxu0 0.0
        %1910 = vmatprep.subr.mxu0 0.0
        %1911 = vmatpush1.msra.mxu0 0.0
        %1912 = vmatprep.subr.mxu0 0.0
        %1913 = vmatpush1.msra.mxu0 0.0
        %1914 = vmatprep.subr.mxu0 0.0
        %1915 = vmatpush1.msra.mxu0 %v1884
        %1916 = vmatprep.subr.mxu0 0.0
        %1917 = vmatpush1.msra.mxu0 %v1883
        %1918 = vmatprep.subr.mxu0 0.0
        %1919 = vmatpush1.msra.mxu0 %v1882
        %1920 = vmatprep.subr.mxu0 0.0
        %1921 = vmatpush1.msra.mxu0 %v1881
        %1922 = vmatprep.subr.mxu0 0.0
        %1923 = vmatpush2.msra.mxu0 0.0
        %1924 = vmatprep.subr.mxu0 0.0
        %1925 = vmatpush2.msra.mxu0 0.0
        %1926 = vmatprep.subr.mxu0 0.0
        %1927 = vmatpush2.msra.mxu0 0.0
        %1928 = vmatprep.subr.mxu0 0.0
        %1929 = vmatpush2.msra.mxu0 0.0
        %1930 = vmatprep.subr.mxu0 0.0
        %1931 = vmatpush2.msra.mxu0 0.0
        %1932 = vmatprep.subr.mxu0 0.0
        %1933 = vmatpush2.msra.mxu0 0.0
        %1934 = vmatprep.subr.mxu0 0.0
        %1935 = vmatpush2.msra.mxu0 0.0
        %1936 = vmatprep.subr.mxu0 0.0
        %1937 = vmatpush2.msra.mxu0 0.0
        %1938 = vmatprep.subr.mxu0 0.0
        %1939 = vmatpush2.msra.mxu0 0.0
        %1940 = vmatprep.subr.mxu0 0.0
        %1941 = vmatpush2.msra.mxu0 0.0
        %1942 = vmatprep.subr.mxu0 0.0
        %1943 = vmatpush2.msra.mxu0 0.0
        %1944 = vmatprep.subr.mxu0 0.0
        %1945 = vmatpush2.msra.mxu0 0.0
        %1946 = vmatprep.subr.mxu0 0.0
        %1947 = vmatpush2.msra.mxu0 0.0
        %1948 = vmatprep.subr.mxu0 0.0
        %1949 = vmatpush2.msra.mxu0 0.0
        %1950 = vmatprep.subr.mxu0 0.0
        %1951 = vmatpush2.msra.mxu0 0.0
        %1952 = vmatprep.subr.mxu0 0.0
        %1953 = vmatpush2.msra.mxu0 0.0
        %1954 = vmatprep.mubr.f32.mxu0 0.0
        %1955 = vmatmul.mubr.f32.gmra.mxu0 %v1888
        %v1956 = vpop.f32.mrf.mxu0
        %v1957 = vadd.f32 0.0, %v1956
        %v1958 = vpop.f32.mrf.mxu0
        %1959 = vdwg.mxu0
        %1961 = vrot.lane.b32.xlu0 %v1957, 32
        %v1962 = vpop.permute.xlu0 %1961
        %v1964 = vadd.f32 %v1728, %v1962
        %v1965 = vadd.f32 %v1964, %v1067
        %1967 = vrot.lane.b32.xlu0 %v1887, 64
        %v1968 = vpop.permute.xlu0 %1967
        %v1970 = vlaneseq
        %v1971 = vshrl.u32 %v1970, 7
        %v1972 = vsub.s32 %v1074, %v1971
        %v1973 = vrot.slane %v1858, %v1972
        %v1974 = vlaneseq
        %v1975 = vshrl.u32 %v1974, 7
        %v1976 = vsub.s32 %v1074, %v1975
        %v1977 = vrot.slane %v1863, %v1976
        %v1978 = vsel %vm890, %v1977, %v1973
        %v1980 = vsel %vm727, %v1658, %v1965
        %v1981 = vsel %vm617, %v1980, %v1968
        %v1982 = vsel %vm1087, %v1981, %v1978
        %v1983 = vsel %vm1089, %v1982, 0.0
        %s1984 = scalar_lea.vmem %s488, 4 [#allocation16]
        %1985 = vst [vmem:[%s1984] sm:$0x3] %v1983
        %1987 = vrot.lane.b32.xlu0 %v1651, 64
        %v1988 = vpop.permute.xlu0 %1987
        %v1990 = vsel %vm727, %v1887, %v1988
        %vm1991 = vcmask 517120
        %1992 = vst.msk [vmem:[#allocation3] sm:$0x3] %vm1991, %v1990
        %1994 = vrot.lane.b32.xlu0 %v1645, 96
        %v1995 = vpop.permute.xlu0 %1994
        %vm1997 = vcmask 254976
        %1998 = vst.msk [vmem:[#allocation4] sm:$0x3] %vm1997, %v1995
        %s1999 = sand.u32 %s279, 1
        %s2000 = scalar_lea.sflag [#allocation7], %s1999
        %s2001 = sand.u32 %s279, 1
        %s2002 = smul.addr %s2001, 6
        %s2003 = scalar_lea.vmem [#allocation16], %s2002
        // Predicated region
        $region89: #{tpu_custom_call.1} parent=59 // pred_check
          %p2004 = pneg %p289
        $region90: #{tpu_custom_call.1} parent=59 // pred_check_branch
          %2006 = sbr.rel (%p2004) target = $region92
        $region91: #{tpu_custom_call.1} parent=59 // pred_region
          %s2007 = smul.u32 3, %s35
          %s2009 = ssub.s32 96, 96
          %2010 = vsyncadd %s2000, %s2009
          %s2011 = sadd.s32 %s34, %s2007
          %s2012 = smul.addr %s2011, 32
          %s2013 = scalar_lea.hbm %s10, %s2012
          %s2014 = sshll.u32 %s2003, 4
          %s2015 = int_to_ptr.vmem [resolvable:$true] %s2014
          %2020 = dma.vmem_to_hbm [thread:$0]  %s2015, 96, %s2013, %s2000, 32, 32, 2
        $region92: #{tpu_custom_call.1} parent=59 // pred_fallthru
          _
      $region60: #{tpu_custom_call.1} parent=5 // pred_fallthru
        _
      %p2021 = scmp.le.s32.totalorder 2, %s25
      // Predicated region
      $region93: #{tpu_custom_call.1} parent=5 // pred_check
        %p2022 = pneg %p2021
      $region94: #{tpu_custom_call.1} parent=5 // pred_check_branch
        %2024 = sbr.rel (%p2022) target = $region96
      $region95: #{tpu_custom_call.1} parent=5 // pred_region
        %s2025 = ssub.s32 %s25, 2
        // Predicated region
        $region97: #{tpu_custom_call.1} parent=95 // pred_check
          %p2026 = pneg %p295
        $region98: #{tpu_custom_call.1} parent=95 // pred_check_branch
          %2028 = sbr.rel (%p2026) target = $region100
        $region99: #{tpu_custom_call.1} parent=95 // pred_region
          %s2029 = sand.u32 %s280, 1
          %s2030 = scalar_lea.sflag [#allocation7], %s2029
          %s2031 = sand.u32 %s280, 1
          %s2032 = smul.addr %s2031, 6
          %s2033 = scalar_lea.vmem [#allocation16], %s2032
          %2034 = dma.done %s2030, 96
        $region100: #{tpu_custom_call.1} parent=95 // pred_fallthru
          _
      $region96: #{tpu_custom_call.1} parent=5 // pred_fallthru
        _
    $region6: #{tpu_custom_call.1} parent=1 // loop_footer
      %s29 = sadd.s32 1, %s25
    $region7: #{tpu_custom_call.1} parent=1 // loop_footer_branch
      %24 = sbr.rel target = $region3
    $region8: #{tpu_custom_call.1} parent=1 // loop_exit
      _
    %2035 = vsyncpa [#allocation6], 1
    %s2036 = scalar_lea.sflag [#allocation6], 1
    %2037 = vsyncpa %s2036, 1
    %2038 = vsyncpa [#allocation9], 1
    %2039 = vsyncpa [#allocation12], 1
    %2040 = vsyncpa [#allocation15], 1
    %2041 = vsyncpa [#allocation7], 1
    %s2042 = scalar_lea.sflag [#allocation7], 1
    %2043 = vsyncpa %s2042, 1

</llo_original>
